<compile_context>
chip_gen: v5e
topology: v5e:2x2
jax: 0.10.0
libtpu: 0.0.40
codegen_flags: <defaults>
</compile_context>

<pallas_src>
import functools
import math

import jax
import jax.numpy as jnp
from jax.experimental import pallas as pl
from jax.experimental.pallas import tpu as pltpu

LANE = 128  # TPU lane width; fused (mu|logstd) output is zero-padded to this.


# ----------------------------------------------------------------------------
# Pallas kernel: one group of G block-diagonally packed graphs per grid step
# ----------------------------------------------------------------------------
def _vpfae_tag_kernel(x_ref, a_tag_ref, a_gcn_ref,
                      w1_ref, b1_ref, w2_ref, b2_ref, wz_ref, bz_ref,
                      out_ref, *, K):
    f32 = jnp.float32
    bf16 = jnp.bfloat16

    a_tag = a_tag_ref[0]                               # [M, M] bf16 (block-diag)

    def tag_layer(h, w_ref, b_ref):
        # H = [h | A h | ... | A^K h]  (hops are serially dependent; the weight
        # contraction becomes one deep MXU matmul).
        hops = [h]
        for _ in range(K):
            h = jnp.dot(a_tag, h, preferred_element_type=f32).astype(bf16)
            hops.append(h)
        hcat = jnp.concatenate(hops, axis=-1)          # [M, (K+1)*C] bf16
        out = jnp.dot(hcat, w_ref[...], preferred_element_type=f32)
        return jnp.maximum(out + b_ref[...], 0.0)

    h1 = tag_layer(x_ref[0], w1_ref, b1_ref).astype(bf16)
    h2 = tag_layer(h1, w2_ref, b2_ref).astype(bf16)

    # Fused GCNConv producing [mu | logstd | zero-pad]: one lane-dense store.
    z = jnp.dot(h2, wz_ref[...], preferred_element_type=f32).astype(bf16)
    out_ref[0] = (jnp.dot(a_gcn_ref[0], z, preferred_element_type=f32)
                  + bz_ref[...])


# ----------------------------------------------------------------------------
# Parameter packing (host-side layout plumbing, done once)
# ----------------------------------------------------------------------------
def pack_params(params, *, K, out_channels, lane=LANE):
    kp1, c_in, l1 = params["w1"].shape
    l2 = params["w2"].shape[2]
    assert kp1 == K + 1
    w1 = params["w1"].reshape(kp1 * c_in, l1)          # stacked hop weights
    w2 = params["w2"].reshape(kp1 * l1, l2)
    wz = jnp.zeros((l2, lane), jnp.float32)
    wz = wz.at[:, :out_channels].set(params["wmu"])
    wz = wz.at[:, out_channels:2 * out_channels].set(params["wls"])
    bz = jnp.zeros((1, lane), jnp.float32)
    bz = bz.at[:, :out_channels].set(params["bmu"])
    bz = bz.at[:, out_channels:2 * out_channels].set(params["bls"])
    return w1, params["b1"], w2, params["b2"], wz, bz


def _pick_group_size(B, N, max_rows=512):
    """Largest divisor of B whose block-diag stays <= max_rows, keeping >=2 steps."""
    candidates = [g for g in range(1, B + 1) if B % g == 0 and g * N <= max_rows]
    if not candidates:
        return 1
    multi_step = [g for g in candidates if B // g >= 2]
    return max(multi_step) if multi_step else max(candidates)


def _block_diag_groups(a, num_groups, G):
    """[B, N, N] -> [num_groups, G*N, G*N] block-diagonal per group (host glue)."""
    _, N, _ = a.shape
    a = a.reshape(num_groups, G, N, N)
    out = jnp.zeros((num_groups, G * N, G * N), a.dtype)
    for g in range(G):
        out = out.at[:, g * N:(g + 1) * N, g * N:(g + 1) * N].set(a[:, g])
    return out


# ----------------------------------------------------------------------------
# Wrapper: batched pallas_call with a parallel graph-group grid
# ----------------------------------------------------------------------------
def vpfae_tag_forward(x, a_tag, a_gcn, params, *, K, out_channels, max_rows=512):
    B, N, c_in = x.shape
    assert 2 * out_channels <= LANE
    G = _pick_group_size(B, N, max_rows)
    num_groups = B // G
    M = G * N

    w1, b1, w2, b2, wz, bz = pack_params(params, K=K, out_channels=out_channels)
    l1, l2 = w1.shape[1], w2.shape[1]

    bf16 = jnp.bfloat16
    x_g = x.reshape(num_groups, M, c_in).astype(bf16)
    at_g = _block_diag_groups(a_tag, num_groups, G).astype(bf16)
    ag_g = _block_diag_groups(a_gcn, num_groups, G).astype(bf16)

    kernel = functools.partial(_vpfae_tag_kernel, K=K)

    def per_group(shape):
        return pl.BlockSpec((1,) + shape, lambda g: (g, 0, 0))

    def resident(shape):  # constant block index -> stays in VMEM across grid steps
        return pl.BlockSpec(shape, lambda g: (0,) * len(shape))

    out = pl.pallas_call(
        kernel,
        out_shape=jax.ShapeDtypeStruct((num_groups, M, LANE), jnp.float32),
        grid=(num_groups,),
        in_specs=[
            per_group((M, c_in)),                      # x      (bf16)
            per_group((M, M)),                         # A_tag  (bf16, block-diag)
            per_group((M, M)),                         # A_gcn  (bf16, block-diag)
            resident(((K + 1) * c_in, l1)),            # W1 stacked (bf16)
            resident((1, l1)),                         # b1 (f32)
            resident(((K + 1) * l1, l2)),              # W2 stacked (bf16)
            resident((1, l2)),                         # b2 (f32)
            resident((l2, LANE)),                      # [Wmu | Wls | 0] (bf16)
            resident((1, LANE)),                       # [bmu | bls | 0] (f32)
        ],
        out_specs=pl.BlockSpec((1, M, LANE), lambda g: (g, 0, 0)),
        compiler_params=pltpu.CompilerParams(
            dimension_semantics=("parallel",),
            vmem_limit_bytes=32 * 1024 * 1024,
        ),
    )(x_g, at_g, ag_g,
      w1.astype(bf16), b1, w2.astype(bf16), b2, wz.astype(bf16), bz)

    out = out.reshape(B, N, LANE)
    mu = out[..., :out_channels]
    logstd = out[..., out_channels:2 * out_channels]
    return mu, logstd


# ----------------------------------------------------------------------------
# Glue: edge_index -> dense normalized adjacency (PyG gcn_norm semantics)
# ----------------------------------------------------------------------------
def normalized_dense_adj(edge_index, num_nodes, add_self_loops):
    row, col = edge_index[0], edge_index[1]            # message: row (src) -> col (dst)
    if add_self_loops:
        loop = jnp.arange(num_nodes, dtype=edge_index.dtype)
        row = jnp.concatenate([row, loop])
        col = jnp.concatenate([col, loop])
    w = jnp.ones(row.shape[0], dtype=jnp.float32)
    deg = jnp.zeros(num_nodes, dtype=jnp.float32).at[col].add(w)
    dinv = jnp.where(deg > 0, 1.0 / jnp.sqrt(deg), 0.0)
    norm = dinv[row] * w * dinv[col]
    # out_i = sum_{(j->i)} norm * x_j  =>  A[i, j] accumulates norm
    return jnp.zeros((num_nodes, num_nodes), dtype=jnp.float32).at[col, row].add(norm)


# ----------------------------------------------------------------------------
# References
# ----------------------------------------------------------------------------
def _reference_one_graph_bf16(x, a_tag, a_gcn, w1, b1, w2, b2, wz, bz, *, K):
    """Mirrors the kernel math exactly (bf16 matmul inputs, f32 accumulation)."""
    bf16, f32 = jnp.bfloat16, jnp.float32
    at = a_tag.astype(bf16)

    def tag(h_bf, w, b):
        hops = [h_bf]
        h = h_bf
        for _ in range(K):
            h = jnp.dot(at, h, preferred_element_type=f32).astype(bf16)
            hops.append(h)
        hcat = jnp.concatenate(hops, axis=-1)
        out = jnp.dot(hcat, w.astype(bf16), preferred_element_type=f32)
        return jnp.maximum(out + b, 0.0)

    h1 = tag(x.astype(bf16), w1, b1).astype(bf16)
    h2 = tag(h1, w2, b2).astype(bf16)
    z = jnp.dot(h2, wz.astype(bf16), preferred_element_type=f32).astype(bf16)
    return jnp.dot(a_gcn.astype(bf16), z, preferred_element_type=f32) + bz


def _reference_one_graph_f32(x, a_tag, a_gcn, params, *, K):
    """Pure-f32 math of the original PyTorch module (per graph)."""
    def tag(h_in, w, b):
        out = h_in @ w[0]
        h = h_in
        for k in range(1, K + 1):
            h = a_tag @ h
            out = out + h @ w[k]
        return jnp.maximum(out + b, 0.0)

    h1 = tag(x, params["w1"], params["b1"])
    h2 = tag(h1, params["w2"], params["b2"])
    mu = a_gcn @ (h2 @ params["wmu"]) + params["bmu"]
    ls = a_gcn @ (h2 @ params["wls"]) + params["bls"]
    return mu, ls


# ----------------------------------------------------------------------------
# Deterministic parameter construction (matches vPFAE_TAG.__init__ shapes)
# ----------------------------------------------------------------------------
def make_params(key, in_channels, out_channels, K):
    layer1_out = in_channels - math.floor((in_channels - out_channels) / 3)
    layer2_out = in_channels - math.floor(2 * (in_channels - out_channels) / 3)
    ks = jax.random.split(key, 8)
    scale = 0.1
    return {
        "w1": scale * jax.random.normal(ks[0], (K + 1, in_channels, layer1_out), jnp.float32),
        "b1": scale * jax.random.normal(ks[1], (1, layer1_out), jnp.float32),
        "w2": scale * jax.random.normal(ks[2], (K + 1, layer1_out, layer2_out), jnp.float32),
        "b2": scale * jax.random.normal(ks[3], (1, layer2_out), jnp.float32),
        "wmu": scale * jax.random.normal(ks[4], (layer2_out, out_channels), jnp.float32),
        "bmu": scale * jax.random.normal(ks[5], (1, out_channels), jnp.float32),
        "wls": scale * jax.random.normal(ks[6], (layer2_out, out_channels), jnp.float32),
        "bls": scale * jax.random.normal(ks[7], (1, out_channels), jnp.float32),
    }


if __name__ == "__main__":
    B = 8             # batch of graphs (grouped onto the parallel grid axis)
    N = 32            # nodes per graph
    IN_CH = 16        # in_channels
    OUT_CH = 4        # out_channels (latent dim)
    K = 2             # TAGConv hop count

    key = jax.random.PRNGKey(0)
    k_x, k_p = jax.random.split(key)

    # Node features  x: [B, N, IN_CH]
    x = jax.random.normal(k_x, (B, N, IN_CH), jnp.float32)

    # Deterministic per-graph circulant graphs (undirected), densified & normalized.
    a_tag_list, a_gcn_list = [], []
    for b in range(B):
        src = jnp.arange(N, dtype=jnp.int32)
        dst = (src + 1 + b) % N
        edge_index = jnp.stack([jnp.concatenate([src, dst]),
                                jnp.concatenate([dst, src])], axis=0)
        a_tag_list.append(normalized_dense_adj(edge_index, N, add_self_loops=False))
        a_gcn_list.append(normalized_dense_adj(edge_index, N, add_self_loops=True))
    a_tag = jnp.stack(a_tag_list)   # [B, N, N]  TAGConv gcn_norm (no self loops)
    a_gcn = jnp.stack(a_gcn_list)   # [B, N, N]  GCNConv gcn_norm (self loops)

    params = make_params(k_p, IN_CH, OUT_CH, K)

    mu, logstd = vpfae_tag_forward(x, a_tag, a_gcn, params, K=K, out_channels=OUT_CH)
    jax.block_until_ready((mu, logstd))
    assert mu.shape == (B, N, OUT_CH) and logstd.shape == (B, N, OUT_CH)

    # --- correctness check 1: bf16-matched reference (tight tolerance) ---
    w1, b1, w2, b2, wz, bz = pack_params(params, K=K, out_channels=OUT_CH)
    ref_bf16 = jax.vmap(
        lambda xb, atb, agb: _reference_one_graph_bf16(
            xb, atb, agb, w1, b1, w2, b2, wz, bz, K=K)
    )(x, a_tag, a_gcn)
    mu_ref = ref_bf16[..., :OUT_CH]
    ls_ref = ref_bf16[..., OUT_CH:2 * OUT_CH]
    assert jnp.allclose(mu, mu_ref, atol=2e-3, rtol=2e-3)
    assert jnp.allclose(logstd, ls_ref, atol=2e-3, rtol=2e-3)

    # --- correctness check 2: pure-f32 module semantics (loose, bf16 rounding) ---
    mu_f32, ls_f32 = jax.vmap(
        lambda xb, atb, agb: _reference_one_graph_f32(xb, atb, agb, params, K=K)
    )(x, a_tag, a_gcn)
    assert jnp.allclose(mu, mu_f32, atol=5e-2)
    assert jnp.allclose(logstd, ls_f32, atol=5e-2)

    print("KERNEL_OK")
</pallas_src>

<mosaic_0001>
module attributes {stable_mosaic.version = 11 : i64} {
  func.func @_vpfae_tag_kernel(%arg0: i32, %arg1: memref<1x128x16xbf16, #tpu.memory_space<vmem>>, %arg2: memref<1x128x128xbf16, #tpu.memory_space<vmem>>, %arg3: memref<1x128x128xbf16, #tpu.memory_space<vmem>>, %arg4: memref<48x12xbf16, #tpu.memory_space<vmem>>, %arg5: memref<1x12xf32, #tpu.memory_space<vmem>>, %arg6: memref<36x8xbf16, #tpu.memory_space<vmem>>, %arg7: memref<1x8xf32, #tpu.memory_space<vmem>>, %arg8: memref<8x128xbf16, #tpu.memory_space<vmem>>, %arg9: memref<1x128xf32, #tpu.memory_space<vmem>>, %arg10: memref<1x128x128xf32, #tpu.memory_space<vmem>>) attributes {dimension_semantics = [#tpu.dimension_semantics<parallel>], iteration_bounds = array<i64: 2>, scalar_prefetch = 0 : i64, scratch_operands = 0 : i64, tpu.core_type = #tpu.core_type<tc>, window_params = [{transform_indices = @transform_0, window_bounds = array<i64: 1, 128, 16>}, {transform_indices = @transform_1, window_bounds = array<i64: 1, 128, 128>}, {transform_indices = @transform_2, window_bounds = array<i64: 1, 128, 128>}, {pipeline_mode = #tpu.pipeline_mode<synchronous>, transform_indices = @transform_3, window_bounds = array<i64: 48, 12>}, {pipeline_mode = #tpu.pipeline_mode<synchronous>, transform_indices = @transform_4, window_bounds = array<i64: 1, 12>}, {pipeline_mode = #tpu.pipeline_mode<synchronous>, transform_indices = @transform_5, window_bounds = array<i64: 36, 8>}, {pipeline_mode = #tpu.pipeline_mode<synchronous>, transform_indices = @transform_6, window_bounds = array<i64: 1, 8>}, {pipeline_mode = #tpu.pipeline_mode<synchronous>, transform_indices = @transform_7, window_bounds = array<i64: 8, 128>}, {pipeline_mode = #tpu.pipeline_mode<synchronous>, transform_indices = @transform_8, window_bounds = array<i64: 1, 128>}, {transform_indices = @transform_9, window_bounds = array<i64: 1, 128, 128>}]} {
    %c0 = arith.constant 0 : index
    %c0_0 = arith.constant 0 : index
    %c0_1 = arith.constant 0 : index
    %0 = vector.load %arg2[%c0, %c0_0, %c0_1] : memref<1x128x128xbf16, #tpu.memory_space<vmem>>, vector<1x128x128xbf16>
    %1 = vector.shape_cast %0 : vector<1x128x128xbf16> to vector<128x128xbf16>
    %c0_2 = arith.constant 0 : index
    %c0_3 = arith.constant 0 : index
    %c0_4 = arith.constant 0 : index
    %2 = vector.load %arg1[%c0_2, %c0_3, %c0_4] : memref<1x128x16xbf16, #tpu.memory_space<vmem>>, vector<1x128x16xbf16>
    %3 = vector.shape_cast %2 : vector<1x128x16xbf16> to vector<128x16xbf16>
    %cst = arith.constant dense<0.000000e+00> : vector<128x16xf32>
    %4 = tpu.matmul %1, %3, %cst {dimension_numbers = #tpu.dot_dimension_numbers<[1], [0], [0], [1], [0, 0, 1, 1], [], []>} : vector<128x128xbf16>, vector<128x16xbf16>, vector<128x16xf32> -> vector<128x16xf32>
    %5 = arith.truncf %4 : vector<128x16xf32> to vector<128x16xbf16>
    %cst_5 = arith.constant dense<0.000000e+00> : vector<128x16xf32>
    %6 = tpu.matmul %1, %5, %cst_5 {dimension_numbers = #tpu.dot_dimension_numbers<[1], [0], [0], [1], [0, 0, 1, 1], [], []>} : vector<128x128xbf16>, vector<128x16xbf16>, vector<128x16xf32> -> vector<128x16xf32>
    %7 = arith.truncf %6 : vector<128x16xf32> to vector<128x16xbf16>
    %8 = tpu.concatenate %3, %5, %7 in 1 : vector<128x16xbf16>, vector<128x16xbf16>, vector<128x16xbf16> -> vector<128x48xbf16>
    %c0_6 = arith.constant 0 : index
    %c0_7 = arith.constant 0 : index
    %9 = vector.load %arg4[%c0_6, %c0_7] : memref<48x12xbf16, #tpu.memory_space<vmem>>, vector<48x12xbf16>
    %cst_8 = arith.constant dense<0.000000e+00> : vector<128x12xf32>
    %10 = tpu.matmul %8, %9, %cst_8 {dimension_numbers = #tpu.dot_dimension_numbers<[1], [0], [0], [1], [0, 0, 1, 1], [], []>} : vector<128x48xbf16>, vector<48x12xbf16>, vector<128x12xf32> -> vector<128x12xf32>
    %c0_9 = arith.constant 0 : index
    %c0_10 = arith.constant 0 : index
    %11 = vector.load %arg5[%c0_9, %c0_10] : memref<1x12xf32, #tpu.memory_space<vmem>>, vector<1x12xf32>
    %12 = vector.broadcast %11 : vector<1x12xf32> to vector<128x12xf32>
    %13 = arith.addf %10, %12 : vector<128x12xf32>
    %cst_11 = arith.constant 0.000000e+00 : f32
    %14 = vector.broadcast %cst_11 : f32 to vector<128x12xf32>
    %15 = arith.maximumf %13, %14 : vector<128x12xf32>
    %16 = arith.truncf %15 : vector<128x12xf32> to vector<128x12xbf16>
    %cst_12 = arith.constant dense<0.000000e+00> : vector<128x12xf32>
    %17 = tpu.matmul %1, %16, %cst_12 {dimension_numbers = #tpu.dot_dimension_numbers<[1], [0], [0], [1], [0, 0, 1, 1], [], []>} : vector<128x128xbf16>, vector<128x12xbf16>, vector<128x12xf32> -> vector<128x12xf32>
    %18 = arith.truncf %17 : vector<128x12xf32> to vector<128x12xbf16>
    %cst_13 = arith.constant dense<0.000000e+00> : vector<128x12xf32>
    %19 = tpu.matmul %1, %18, %cst_13 {dimension_numbers = #tpu.dot_dimension_numbers<[1], [0], [0], [1], [0, 0, 1, 1], [], []>} : vector<128x128xbf16>, vector<128x12xbf16>, vector<128x12xf32> -> vector<128x12xf32>
    %20 = arith.truncf %19 : vector<128x12xf32> to vector<128x12xbf16>
    %21 = tpu.concatenate %16, %18, %20 in 1 : vector<128x12xbf16>, vector<128x12xbf16>, vector<128x12xbf16> -> vector<128x36xbf16>
    %c0_14 = arith.constant 0 : index
    %c0_15 = arith.constant 0 : index
    %22 = vector.load %arg6[%c0_14, %c0_15] : memref<36x8xbf16, #tpu.memory_space<vmem>>, vector<36x8xbf16>
    %cst_16 = arith.constant dense<0.000000e+00> : vector<128x8xf32>
    %23 = tpu.matmul %21, %22, %cst_16 {dimension_numbers = #tpu.dot_dimension_numbers<[1], [0], [0], [1], [0, 0, 1, 1], [], []>} : vector<128x36xbf16>, vector<36x8xbf16>, vector<128x8xf32> -> vector<128x8xf32>
    %c0_17 = arith.constant 0 : index
    %c0_18 = arith.constant 0 : index
    %24 = vector.load %arg7[%c0_17, %c0_18] : memref<1x8xf32, #tpu.memory_space<vmem>>, vector<1x8xf32>
    %25 = vector.broadcast %24 : vector<1x8xf32> to vector<128x8xf32>
    %26 = arith.addf %23, %25 : vector<128x8xf32>
    %cst_19 = arith.constant 0.000000e+00 : f32
    %27 = vector.broadcast %cst_19 : f32 to vector<128x8xf32>
    %28 = arith.maximumf %26, %27 : vector<128x8xf32>
    %29 = arith.truncf %28 : vector<128x8xf32> to vector<128x8xbf16>
    %c0_20 = arith.constant 0 : index
    %c0_21 = arith.constant 0 : index
    %30 = vector.load %arg8[%c0_20, %c0_21] : memref<8x128xbf16, #tpu.memory_space<vmem>>, vector<8x128xbf16>
    %cst_22 = arith.constant dense<0.000000e+00> : vector<128x128xf32>
    %31 = tpu.matmul %29, %30, %cst_22 {dimension_numbers = #tpu.dot_dimension_numbers<[1], [0], [0], [1], [0, 0, 1, 1], [], []>} : vector<128x8xbf16>, vector<8x128xbf16>, vector<128x128xf32> -> vector<128x128xf32>
    %32 = arith.truncf %31 : vector<128x128xf32> to vector<128x128xbf16>
    %c0_23 = arith.constant 0 : index
    %c0_24 = arith.constant 0 : index
    %c0_25 = arith.constant 0 : index
    %33 = vector.load %arg3[%c0_23, %c0_24, %c0_25] : memref<1x128x128xbf16, #tpu.memory_space<vmem>>, vector<1x128x128xbf16>
    %34 = vector.shape_cast %33 : vector<1x128x128xbf16> to vector<128x128xbf16>
    %cst_26 = arith.constant dense<0.000000e+00> : vector<128x128xf32>
    %35 = tpu.matmul %34, %32, %cst_26 {dimension_numbers = #tpu.dot_dimension_numbers<[1], [0], [0], [1], [0, 0, 1, 1], [], []>} : vector<128x128xbf16>, vector<128x128xbf16>, vector<128x128xf32> -> vector<128x128xf32>
    %c0_27 = arith.constant 0 : index
    %c0_28 = arith.constant 0 : index
    %36 = vector.load %arg9[%c0_27, %c0_28] : memref<1x128xf32, #tpu.memory_space<vmem>>, vector<1x128xf32>
    %37 = vector.broadcast %36 : vector<1x128xf32> to vector<128x128xf32>
    %38 = arith.addf %35, %37 : vector<128x128xf32>
    %c0_29 = arith.constant 0 : index
    %c0_30 = arith.constant 0 : index
    %c0_31 = arith.constant 0 : index
    %39 = vector.load %arg10[%c0_29, %c0_30, %c0_31] : memref<1x128x128xf32, #tpu.memory_space<vmem>>, vector<1x128x128xf32>
    %40 = vector.shape_cast %39 : vector<1x128x128xf32> to vector<128x128xf32>
    %41 = vector.shape_cast %38 : vector<128x128xf32> to vector<1x128x128xf32>
    tpu.vector_store %arg10[%c0_29, %c0_30, %c0_31], %41 {strides = array<i32>} : memref<1x128x128xf32, #tpu.memory_space<vmem>>, vector<1x128x128xf32>,
    return
  }
  func.func @transform_0(%arg0: i32) -> (i32, i32, i32) {
    %c0_i32 = arith.constant 0 : i32
    %c0_i32_0 = arith.constant 0 : i32
    %c0_i32_1 = arith.constant 0 : i32
    return %arg0, %c0_i32, %c0_i32_0 : i32, i32, i32
  }
  func.func @transform_1(%arg0: i32) -> (i32, i32, i32) {
    %c0_i32 = arith.constant 0 : i32
    %c0_i32_0 = arith.constant 0 : i32
    %c0_i32_1 = arith.constant 0 : i32
    return %arg0, %c0_i32, %c0_i32_0 : i32, i32, i32
  }
  func.func @transform_2(%arg0: i32) -> (i32, i32, i32) {
    %c0_i32 = arith.constant 0 : i32
    %c0_i32_0 = arith.constant 0 : i32
    %c0_i32_1 = arith.constant 0 : i32
    return %arg0, %c0_i32, %c0_i32_0 : i32, i32, i32
  }
  func.func @transform_3(%arg0: i32) -> (i32, i32) {
    %c0_i32 = arith.constant 0 : i32
    %c0_i32_0 = arith.constant 0 : i32
    %c0_i32_1 = arith.constant 0 : i32
    return %c0_i32, %c0_i32_0 : i32, i32
  }
  func.func @transform_4(%arg0: i32) -> (i32, i32) {
    %c0_i32 = arith.constant 0 : i32
    %c0_i32_0 = arith.constant 0 : i32
    %c0_i32_1 = arith.constant 0 : i32
    return %c0_i32, %c0_i32_0 : i32, i32
  }
  func.func @transform_5(%arg0: i32) -> (i32, i32) {
    %c0_i32 = arith.constant 0 : i32
    %c0_i32_0 = arith.constant 0 : i32
    %c0_i32_1 = arith.constant 0 : i32
    return %c0_i32, %c0_i32_0 : i32, i32
  }
  func.func @transform_6(%arg0: i32) -> (i32, i32) {
    %c0_i32 = arith.constant 0 : i32
    %c0_i32_0 = arith.constant 0 : i32
    %c0_i32_1 = arith.constant 0 : i32
    return %c0_i32, %c0_i32_0 : i32, i32
  }
  func.func @transform_7(%arg0: i32) -> (i32, i32) {
    %c0_i32 = arith.constant 0 : i32
    %c0_i32_0 = arith.constant 0 : i32
    %c0_i32_1 = arith.constant 0 : i32
    return %c0_i32, %c0_i32_0 : i32, i32
  }
  func.func @transform_8(%arg0: i32) -> (i32, i32) {
    %c0_i32 = arith.constant 0 : i32
    %c0_i32_0 = arith.constant 0 : i32
    %c0_i32_1 = arith.constant 0 : i32
    return %c0_i32, %c0_i32_0 : i32, i32
  }
  func.func @transform_9(%arg0: i32) -> (i32, i32, i32) {
    %c0_i32 = arith.constant 0 : i32
    %c0_i32_0 = arith.constant 0 : i32
    %c0_i32_1 = arith.constant 0 : i32
    return %arg0, %c0_i32, %c0_i32_0 : i32, i32, i32
  }
}

</mosaic_0001>

<llo_original>
// kernel: tpu_custom_call.1
$region0: #{tpu_custom_call.1}
  #allocation0 [shape = 'u32[]', space=smem, size = 0x4, offset = 0x4, fixed_abs, tag = 'smem constant byte address 0x4 - core index']
  #allocation1 [shape = 'u32[72,128]{1,0:T(1,128)}', space=vmem, size = 0x9000, scoped, tag = 'internal scratch']
  %s0 = inlined_call_operand.vmem [shape: bf16[2,128,16], index: 0, kind: input, shape index: {}]
  %s1 = inlined_call_operand.vmem [shape: bf16[2,128,128], index: 1, kind: input, shape index: {}]
  %s2 = inlined_call_operand.hbm [shape: bf16[2,128,128], index: 2, kind: input, shape index: {}]
  %s3 = inlined_call_operand.vmem [shape: bf16[48,12], index: 3, kind: input, shape index: {}]
  %s4 = inlined_call_operand.vmem [shape: f32[1,12], index: 4, kind: input, shape index: {}]
  %s5 = inlined_call_operand.vmem [shape: bf16[36,8], index: 5, kind: input, shape index: {}]
  %s6 = inlined_call_operand.vmem [shape: f32[1,8], index: 6, kind: input, shape index: {}]
  %s7 = inlined_call_operand.vmem [shape: bf16[8,128], index: 7, kind: input, shape index: {}]
  %s8 = inlined_call_operand.vmem [shape: f32[1,128], index: 8, kind: input, shape index: {}]
  %s9 = inlined_call_operand.hbm [shape: f32[2,128,128], index: 9, kind: output, shape index: {}]
  %s10 = sld [smem:[#allocation0]]
  $region73: #{tpu_custom_call.1} parent=0
    _
  %s12 = ssub.s32 1, %s10
  %s13 = scalar_select 0, %s12, %s10
  $region1: #{tpu_custom_call.1} parent=0
    #allocation2 [shape = 'u8[65536]{0}', space=vmem, size = 0x10000, scoped, tag = 'input window, operand 2']
    #allocation3 [shape = 's32[2]{0}', space=sflag, size = 0x8, scoped, tag = 'scoped memory for tpu_custom_call.1']
    #allocation4 [shape = 's32[2]{0}', space=sflag, size = 0x8, scoped, tag = 'scoped memory for tpu_custom_call.1']
    #allocation5 [shape = 'u8[131072]{0}', space=vmem, size = 0x20000, scoped, tag = 'output window, operand 0']
    %14 = vsyncpa [#allocation3], 0
    %s15 = scalar_lea.sflag [#allocation3], 1
    %16 = vsyncpa %s15, 0
    %17 = vsyncpa [#allocation4], 0
    %s18 = scalar_lea.sflag [#allocation4], 1
    %19 = vsyncpa %s18, 0
    loop: start=0, step=1, limit=4
    $region2: #{tpu_custom_call.1} parent=1 // loop_pre_header
      _
    $region3: #{tpu_custom_call.1} parent=1 // loop_header
      %s21 = sphi 0, %s25
      %p22 = scmp.ge.s32.totalorder %s21, 4
      %s31 = sphi 0, %s33
      %s34 = sphi 0, %s31
      %s35 = sphi 0, %s34
      %s51 = sphi 0, %s35
      %s57 = sphi 0, %s59
      %s60 = sphi 0, %s57
      %s61 = sphi 0, %s60
      %s77 = sphi 0, %s61
      %s83 = sphi 0, %s85
      %s86 = sphi 0, %s83
      %s87 = sphi 0, %s86
      %s103 = sphi 0, %s87
      %s107 = sphi 0, %s107
      %s109 = sphi 0, %s107
      %s110 = sphi 0, %s109
      %s124 = sphi 0, %s110
      %s128 = sphi 0, %s128
      %s130 = sphi 0, %s128
      %s131 = sphi 0, %s130
      %s145 = sphi 0, %s131
      %s149 = sphi 0, %s149
      %s151 = sphi 0, %s149
      %s152 = sphi 0, %s151
      %s166 = sphi 0, %s152
      %s170 = sphi 0, %s170
      %s172 = sphi 0, %s170
      %s173 = sphi 0, %s172
      %s187 = sphi 0, %s173
      %s191 = sphi 0, %s191
      %s193 = sphi 0, %s191
      %s194 = sphi 0, %s193
      %s208 = sphi 0, %s194
      %s212 = sphi 0, %s212
      %s214 = sphi 0, %s212
      %s215 = sphi 0, %s214
      %s229 = sphi 0, %s215
      %s235 = sphi 0, %s237
      %s238 = sphi 0, %s235
      %s239 = sphi 0, %s238
      %s255 = sphi 0, %s239
    $region4: #{tpu_custom_call.1} parent=1 // loop_header_branch
      %24 = sbr.rel (%p22) target = $region8
    $region5: #{tpu_custom_call.1} parent=1 // loop_body
      %s26 = ssub.s32 %s21, 1
      %s27 = ssub.s32 %s21, 2
      %s28 = sadd.s32 %s21, 1
      %s29 = ssub.s32 %s21, %s28
      %p30 = scmp.eq.s32.totalorder %s29, 0
      %s32 = sadd.s32 %s31, 1
      %s33 = scalar_select %p30, %s31, %s32
      %p36 = pneg %p30
      %p37 = scmp.eq.s32.totalorder %s21, 1
      %p38 = por %p36, %p37
      %p39 = scmp.ne.s32.totalorder %s31, %s34
      %p40 = scmp.eq.s32.totalorder %s21, 0
      %p41 = por %p39, %p40
      %p42 = scmp.ne.s32.totalorder %s31, %s34
      %p43 = scmp.eq.s32.totalorder %s26, 1
      %p44 = por %p42, %p43
      %p45 = scmp.ne.s32.totalorder %s34, %s35
      %p46 = scmp.eq.s32.totalorder %s26, 0
      %p47 = por %p45, %p46
      %p48 = scmp.ne.s32.totalorder %s34, %s35
      %p49 = scmp.eq.s32.totalorder %s27, 1
      %p50 = por %p48, %p49
      %p52 = scmp.ne.s32.totalorder %s35, %s51
      %p53 = scmp.eq.s32.totalorder %s27, 0
      %p54 = por %p52, %p53
      %s55 = ssub.s32 %s21, %s28
      %p56 = scmp.eq.s32.totalorder %s55, 0
      %s58 = sadd.s32 %s57, 1
      %s59 = scalar_select %p56, %s57, %s58
      %p62 = pneg %p56
      %p63 = scmp.eq.s32.totalorder %s21, 1
      %p64 = por %p62, %p63
      %p65 = scmp.ne.s32.totalorder %s57, %s60
      %p66 = scmp.eq.s32.totalorder %s21, 0
      %p67 = por %p65, %p66
      %p68 = scmp.ne.s32.totalorder %s57, %s60
      %p69 = scmp.eq.s32.totalorder %s26, 1
      %p70 = por %p68, %p69
      %p71 = scmp.ne.s32.totalorder %s60, %s61
      %p72 = scmp.eq.s32.totalorder %s26, 0
      %p73 = por %p71, %p72
      %p74 = scmp.ne.s32.totalorder %s60, %s61
      %p75 = scmp.eq.s32.totalorder %s27, 1
      %p76 = por %p74, %p75
      %p78 = scmp.ne.s32.totalorder %s61, %s77
      %p79 = scmp.eq.s32.totalorder %s27, 0
      %p80 = por %p78, %p79
      %s81 = ssub.s32 %s21, %s28
      %p82 = scmp.eq.s32.totalorder %s81, 0
      %s84 = sadd.s32 %s83, 1
      %s85 = scalar_select %p82, %s83, %s84
      %p88 = pneg %p82
      %p89 = scmp.eq.s32.totalorder %s21, 1
      %p90 = por %p88, %p89
      %p91 = scmp.ne.s32.totalorder %s83, %s86
      %p92 = scmp.eq.s32.totalorder %s21, 0
      %p93 = por %p91, %p92
      %p94 = scmp.ne.s32.totalorder %s83, %s86
      %p95 = scmp.eq.s32.totalorder %s26, 1
      %p96 = por %p94, %p95
      %p97 = scmp.ne.s32.totalorder %s86, %s87
      %p98 = scmp.eq.s32.totalorder %s26, 0
      %p99 = por %p97, %p98
      %p100 = scmp.ne.s32.totalorder %s86, %s87
      %p101 = scmp.eq.s32.totalorder %s27, 1
      %p102 = por %p100, %p101
      %p104 = scmp.ne.s32.totalorder %s87, %s103
      %p105 = scmp.eq.s32.totalorder %s27, 0
      %p106 = por %p104, %p105
      %s108 = sadd.s32 %s107, 1
      %p111 = scmp.eq.s32.totalorder %s21, 1
      %p112 = scmp.ne.s32.totalorder %s107, %s109
      %p113 = scmp.eq.s32.totalorder %s21, 0
      %p114 = por %p112, %p113
      %p115 = scmp.ne.s32.totalorder %s107, %s109
      %p116 = scmp.eq.s32.totalorder %s26, 1
      %p117 = por %p115, %p116
      %p118 = scmp.ne.s32.totalorder %s109, %s110
      %p119 = scmp.eq.s32.totalorder %s26, 0
      %p120 = por %p118, %p119
      %p121 = scmp.ne.s32.totalorder %s109, %s110
      %p122 = scmp.eq.s32.totalorder %s27, 1
      %p123 = por %p121, %p122
      %p125 = scmp.ne.s32.totalorder %s110, %s124
      %p126 = scmp.eq.s32.totalorder %s27, 0
      %p127 = por %p125, %p126
      %s129 = sadd.s32 %s128, 1
      %p132 = scmp.eq.s32.totalorder %s21, 1
      %p133 = scmp.ne.s32.totalorder %s128, %s130
      %p134 = scmp.eq.s32.totalorder %s21, 0
      %p135 = por %p133, %p134
      %p136 = scmp.ne.s32.totalorder %s128, %s130
      %p137 = scmp.eq.s32.totalorder %s26, 1
      %p138 = por %p136, %p137
      %p139 = scmp.ne.s32.totalorder %s130, %s131
      %p140 = scmp.eq.s32.totalorder %s26, 0
      %p141 = por %p139, %p140
      %p142 = scmp.ne.s32.totalorder %s130, %s131
      %p143 = scmp.eq.s32.totalorder %s27, 1
      %p144 = por %p142, %p143
      %p146 = scmp.ne.s32.totalorder %s131, %s145
      %p147 = scmp.eq.s32.totalorder %s27, 0
      %p148 = por %p146, %p147
      %s150 = sadd.s32 %s149, 1
      %p153 = scmp.eq.s32.totalorder %s21, 1
      %p154 = scmp.ne.s32.totalorder %s149, %s151
      %p155 = scmp.eq.s32.totalorder %s21, 0
      %p156 = por %p154, %p155
      %p157 = scmp.ne.s32.totalorder %s149, %s151
      %p158 = scmp.eq.s32.totalorder %s26, 1
      %p159 = por %p157, %p158
      %p160 = scmp.ne.s32.totalorder %s151, %s152
      %p161 = scmp.eq.s32.totalorder %s26, 0
      %p162 = por %p160, %p161
      %p163 = scmp.ne.s32.totalorder %s151, %s152
      %p164 = scmp.eq.s32.totalorder %s27, 1
      %p165 = por %p163, %p164
      %p167 = scmp.ne.s32.totalorder %s152, %s166
      %p168 = scmp.eq.s32.totalorder %s27, 0
      %p169 = por %p167, %p168
      %s171 = sadd.s32 %s170, 1
      %p174 = scmp.eq.s32.totalorder %s21, 1
      %p175 = scmp.ne.s32.totalorder %s170, %s172
      %p176 = scmp.eq.s32.totalorder %s21, 0
      %p177 = por %p175, %p176
      %p178 = scmp.ne.s32.totalorder %s170, %s172
      %p179 = scmp.eq.s32.totalorder %s26, 1
      %p180 = por %p178, %p179
      %p181 = scmp.ne.s32.totalorder %s172, %s173
      %p182 = scmp.eq.s32.totalorder %s26, 0
      %p183 = por %p181, %p182
      %p184 = scmp.ne.s32.totalorder %s172, %s173
      %p185 = scmp.eq.s32.totalorder %s27, 1
      %p186 = por %p184, %p185
      %p188 = scmp.ne.s32.totalorder %s173, %s187
      %p189 = scmp.eq.s32.totalorder %s27, 0
      %p190 = por %p188, %p189
      %s192 = sadd.s32 %s191, 1
      %p195 = scmp.eq.s32.totalorder %s21, 1
      %p196 = scmp.ne.s32.totalorder %s191, %s193
      %p197 = scmp.eq.s32.totalorder %s21, 0
      %p198 = por %p196, %p197
      %p199 = scmp.ne.s32.totalorder %s191, %s193
      %p200 = scmp.eq.s32.totalorder %s26, 1
      %p201 = por %p199, %p200
      %p202 = scmp.ne.s32.totalorder %s193, %s194
      %p203 = scmp.eq.s32.totalorder %s26, 0
      %p204 = por %p202, %p203
      %p205 = scmp.ne.s32.totalorder %s193, %s194
      %p206 = scmp.eq.s32.totalorder %s27, 1
      %p207 = por %p205, %p206
      %p209 = scmp.ne.s32.totalorder %s194, %s208
      %p210 = scmp.eq.s32.totalorder %s27, 0
      %p211 = por %p209, %p210
      %s213 = sadd.s32 %s212, 1
      %p216 = scmp.eq.s32.totalorder %s21, 1
      %p217 = scmp.ne.s32.totalorder %s212, %s214
      %p218 = scmp.eq.s32.totalorder %s21, 0
      %p219 = por %p217, %p218
      %p220 = scmp.ne.s32.totalorder %s212, %s214
      %p221 = scmp.eq.s32.totalorder %s26, 1
      %p222 = por %p220, %p221
      %p223 = scmp.ne.s32.totalorder %s214, %s215
      %p224 = scmp.eq.s32.totalorder %s26, 0
      %p225 = por %p223, %p224
      %p226 = scmp.ne.s32.totalorder %s214, %s215
      %p227 = scmp.eq.s32.totalorder %s27, 1
      %p228 = por %p226, %p227
      %p230 = scmp.ne.s32.totalorder %s215, %s229
      %p231 = scmp.eq.s32.totalorder %s27, 0
      %p232 = por %p230, %p231
      %s233 = ssub.s32 %s21, %s28
      %p234 = scmp.eq.s32.totalorder %s233, 0
      %s236 = sadd.s32 %s235, 1
      %s237 = scalar_select %p234, %s235, %s236
      %p240 = pneg %p234
      %p241 = scmp.eq.s32.totalorder %s21, 1
      %p242 = por %p240, %p241
      %p243 = scmp.ne.s32.totalorder %s235, %s238
      %p244 = scmp.eq.s32.totalorder %s21, 0
      %p245 = por %p243, %p244
      %p246 = scmp.ne.s32.totalorder %s235, %s238
      %p247 = scmp.eq.s32.totalorder %s26, 1
      %p248 = por %p246, %p247
      %p249 = scmp.ne.s32.totalorder %s238, %s239
      %p250 = scmp.eq.s32.totalorder %s26, 0
      %p251 = por %p249, %p250
      %p252 = scmp.ne.s32.totalorder %s238, %s239
      %p253 = scmp.eq.s32.totalorder %s27, 1
      %p254 = por %p252, %p253
      %p256 = scmp.ne.s32.totalorder %s239, %s255
      %p257 = scmp.eq.s32.totalorder %s27, 0
      %p258 = por %p256, %p257
      %p259 = scmp.le.s32.totalorder 1, %s21
      %p260 = scmp.lt.s32.totalorder %s21, 3
      %p261 = pnand %p259, %p260
      %p262 = pneg %p261
      // Predicated region
      $region9: #{tpu_custom_call.1} parent=5 // pred_check
        _
      $region10: #{tpu_custom_call.1} parent=5 // pred_check_branch
        %264 = sbr.rel (%p261) target = $region12
      $region11: #{tpu_custom_call.1} parent=5 // pred_region
        %s265 = ssub.s32 %s21, 1
        // Predicated region
        $region13: #{tpu_custom_call.1} parent=11 // pred_check
          %p266 = pneg %p120
        $region14: #{tpu_custom_call.1} parent=11 // pred_check_branch
          %268 = sbr.rel (%p266) target = $region16
        $region15: #{tpu_custom_call.1} parent=11 // pred_region
          _
        $region16: #{tpu_custom_call.1} parent=11 // pred_fallthru
          _
        // Predicated region
        $region17: #{tpu_custom_call.1} parent=11 // pred_check
          %p269 = pneg %p141
        $region18: #{tpu_custom_call.1} parent=11 // pred_check_branch
          %271 = sbr.rel (%p269) target = $region20
        $region19: #{tpu_custom_call.1} parent=11 // pred_region
          _
        $region20: #{tpu_custom_call.1} parent=11 // pred_fallthru
          _
        // Predicated region
        $region21: #{tpu_custom_call.1} parent=11 // pred_check
          %p272 = pneg %p162
        $region22: #{tpu_custom_call.1} parent=11 // pred_check_branch
          %274 = sbr.rel (%p272) target = $region24
        $region23: #{tpu_custom_call.1} parent=11 // pred_region
          _
        $region24: #{tpu_custom_call.1} parent=11 // pred_fallthru
          _
        // Predicated region
        $region25: #{tpu_custom_call.1} parent=11 // pred_check
          %p275 = pneg %p183
        $region26: #{tpu_custom_call.1} parent=11 // pred_check_branch
          %277 = sbr.rel (%p275) target = $region28
        $region27: #{tpu_custom_call.1} parent=11 // pred_region
          _
        $region28: #{tpu_custom_call.1} parent=11 // pred_fallthru
          _
        // Predicated region
        $region29: #{tpu_custom_call.1} parent=11 // pred_check
          %p278 = pneg %p204
        $region30: #{tpu_custom_call.1} parent=11 // pred_check_branch
          %280 = sbr.rel (%p278) target = $region32
        $region31: #{tpu_custom_call.1} parent=11 // pred_region
          _
        $region32: #{tpu_custom_call.1} parent=11 // pred_fallthru
          _
        // Predicated region
        $region33: #{tpu_custom_call.1} parent=11 // pred_check
          %p281 = pneg %p225
        $region34: #{tpu_custom_call.1} parent=11 // pred_check_branch
          %283 = sbr.rel (%p281) target = $region36
        $region35: #{tpu_custom_call.1} parent=11 // pred_region
          _
        $region36: #{tpu_custom_call.1} parent=11 // pred_fallthru
          _
      $region12: #{tpu_custom_call.1} parent=5 // pred_fallthru
        _
      %p284 = scmp.lt.s32.totalorder %s21, 2
      // Predicated region
      $region37: #{tpu_custom_call.1} parent=5 // pred_check
        %p285 = pneg %p284
      $region38: #{tpu_custom_call.1} parent=5 // pred_check_branch
        %287 = sbr.rel (%p285) target = $region40
      $region39: #{tpu_custom_call.1} parent=5 // pred_region
        // Predicated region
        $region41: #{tpu_custom_call.1} parent=39 // pred_check
          %p288 = pneg %p41
        $region42: #{tpu_custom_call.1} parent=39 // pred_check_branch
          %290 = sbr.rel (%p288) target = $region44
        $region43: #{tpu_custom_call.1} parent=39 // pred_region
          %p291 = scmp.lt.s32.totalorder %s21, 1
          %s292 = scalar_select %p291, %s21, 1
          %s293 = smul.addr %s292, 16
          %s294 = smul.addr %s293, 4
          %s295 = scalar_lea.vmem %s0, %s294
        $region44: #{tpu_custom_call.1} parent=39 // pred_fallthru
          _
        // Predicated region
        $region45: #{tpu_custom_call.1} parent=39 // pred_check
          %p296 = pneg %p67
        $region46: #{tpu_custom_call.1} parent=39 // pred_check_branch
          %298 = sbr.rel (%p296) target = $region48
        $region47: #{tpu_custom_call.1} parent=39 // pred_region
          %p299 = scmp.lt.s32.totalorder %s21, 1
          %s300 = scalar_select %p299, %s21, 1
          %s301 = smul.addr %s300, 16
          %s302 = smul.addr %s301, 4
          %s303 = scalar_lea.vmem %s1, %s302
        $region48: #{tpu_custom_call.1} parent=39 // pred_fallthru
          _
        // Predicated region
        $region49: #{tpu_custom_call.1} parent=39 // pred_check
          %p304 = pneg %p93
        $region50: #{tpu_custom_call.1} parent=39 // pred_check_branch
          %306 = sbr.rel (%p304) target = $region52
        $region51: #{tpu_custom_call.1} parent=39 // pred_region
          %s307 = sand.u32 %s83, 1
          %s308 = scalar_lea.sflag [#allocation3], %s307
          %s309 = sand.u32 %s83, 1
          %s310 = smul.addr %s309, 64
          %s311 = scalar_lea.vmem [#allocation2], %s310
          %313 = vsyncadd %s308, 0
          %s314 = smul.addr %s21, 16
          %s315 = smul.addr %s314, 4
          %s316 = scalar_lea.hbm %s2, %s315
          %s317 = sshll.u32 %s316, 4
          %s318 = int_to_ptr.hbm [resolvable:$true] %s317
          %s319 = sshll.u32 %s311, 4
          %s320 = int_to_ptr.vmem [resolvable:$true] %s319
          %325 = dma.hbm_to_vmem [thread:$0]  %s318, 1024, %s320, %s308, 64, 64, 4
        $region52: #{tpu_custom_call.1} parent=39 // pred_fallthru
          _
      $region40: #{tpu_custom_call.1} parent=5 // pred_fallthru
        _
      %p326 = scmp.le.s32.totalorder 1, %s21
      %p327 = scmp.lt.s32.totalorder %s21, 3
      %p328 = pnand %p326, %p327
      %p329 = pneg %p328
      // Predicated region
      $region53: #{tpu_custom_call.1} parent=5 // pred_check
        _
      $region54: #{tpu_custom_call.1} parent=5 // pred_check_branch
        %331 = sbr.rel (%p328) target = $region56
      $region55: #{tpu_custom_call.1} parent=5 // pred_region
        %s332 = ssub.s32 %s21, 1
        %s333 = sand.u32 %s86, 1
        %s334 = scalar_lea.sflag [#allocation3], %s333
        %s335 = sand.u32 %s86, 1
        %s336 = smul.addr %s335, 64
        %s337 = scalar_lea.vmem [#allocation2], %s336
        // Predicated region
        $region57: #{tpu_custom_call.1} parent=55 // pred_check
          %p338 = pneg %p99
        $region58: #{tpu_custom_call.1} parent=55 // pred_check_branch
          %340 = sbr.rel (%p338) target = $region60
        $region59: #{tpu_custom_call.1} parent=55 // pred_region
          %342 = dma.done %s334, 1024
        $region60: #{tpu_custom_call.1} parent=55 // pred_fallthru
          _
        %p343 = scmp.lt.s32.totalorder %s26, 1
        %s344 = scalar_select %p343, %s26, 1
        %s345 = smul.addr %s344, 16
        %s346 = smul.addr %s345, 4
        %s347 = scalar_lea.vmem %s0, %s346
        %p348 = pneg %p47
        %p349 = pneg %p44
        %p350 = scmp.lt.s32.totalorder %s26, 1
        %s351 = scalar_select %p350, %s26, 1
        %s352 = smul.addr %s351, 16
        %s353 = smul.addr %s352, 4
        %s354 = scalar_lea.vmem %s1, %s353
        %p355 = pneg %p73
        %p356 = pneg %p70
        %s357 = sand.u32 %s86, 1
        %s358 = scalar_lea.sflag [#allocation3], %s357
        %s359 = sand.u32 %s86, 1
        %s360 = smul.addr %s359, 64
        %s361 = scalar_lea.vmem [#allocation2], %s360
        %p362 = pneg %p99
        %p363 = pneg %p96
        %p364 = pneg %p120
        %p365 = pneg %p117
        %p366 = pneg %p141
        %p367 = pneg %p138
        %p368 = pneg %p162
        %p369 = pneg %p159
        %p370 = pneg %p183
        %p371 = pneg %p180
        %p372 = pneg %p204
        %p373 = pneg %p201
        %p374 = pneg %p225
        %p375 = pneg %p222
        %p376 = pneg %p251
        %p377 = pneg %p248
        %s378 = sand.u32 %s238, 1
        %s379 = scalar_lea.sflag [#allocation4], %s378
        %s380 = sand.u32 %s238, 1
        %s381 = smul.addr %s380, 128
        %s382 = scalar_lea.vmem [#allocation5], %s381
        %p383 = scmp.lt.s32.totalorder %s26, 1
        %s384 = scalar_select %p383, %s26, 1
        %s385 = smul.addr %s384, 16
        %s386 = smul.addr %s385, 4
        %s387 = scalar_lea.vmem %s0, %s386
        %p388 = scmp.lt.s32.totalorder %s26, 1
        %s389 = scalar_select %p388, %s26, 1
        %s390 = smul.addr %s389, 16
        %s391 = smul.addr %s390, 4
        %s392 = scalar_lea.vmem %s1, %s391
        %v394 = vld [vmem:[%s392] sm:$0xf]
        %v395 = vld [vmem:[%s392 + $0x4] sm:$0xf]
        %v396 = vld [vmem:[%s392 + $0x8] sm:$0xf]
        %v397 = vld [vmem:[%s392 + $0xc] sm:$0xf]
        %v398 = vld [vmem:[%s392 + $0x10] sm:$0xf]
        %v399 = vld [vmem:[%s392 + $0x14] sm:$0xf]
        %v400 = vld [vmem:[%s392 + $0x18] sm:$0xf]
        %v401 = vld [vmem:[%s392 + $0x1c] sm:$0xf]
        %v402 = vld [vmem:[%s392 + $0x20] sm:$0xf]
        %v403 = vld [vmem:[%s392 + $0x24] sm:$0xf]
        %v404 = vld [vmem:[%s392 + $0x28] sm:$0xf]
        %v405 = vld [vmem:[%s392 + $0x2c] sm:$0xf]
        %v406 = vld [vmem:[%s392 + $0x30] sm:$0xf]
        %v407 = vld [vmem:[%s392 + $0x34] sm:$0xf]
        %v408 = vld [vmem:[%s392 + $0x38] sm:$0xf]
        %v409 = vld [vmem:[%s392 + $0x3c] sm:$0xf]
        %v410 = vld [vmem:[%s387] sm:$0xf]
        %v411 = vld [vmem:[%s387 + $0x4] sm:$0xf]
        %v412 = vld [vmem:[%s387 + $0x8] sm:$0xf]
        %v413 = vld [vmem:[%s387 + $0xc] sm:$0xf]
        %v414 = vld [vmem:[%s387 + $0x10] sm:$0xf]
        %v415 = vld [vmem:[%s387 + $0x14] sm:$0xf]
        %v416 = vld [vmem:[%s387 + $0x18] sm:$0xf]
        %v417 = vld [vmem:[%s387 + $0x1c] sm:$0xf]
        %v418 = vld [vmem:[%s387 + $0x20] sm:$0xf]
        %v419 = vld [vmem:[%s387 + $0x24] sm:$0xf]
        %v420 = vld [vmem:[%s387 + $0x28] sm:$0xf]
        %v421 = vld [vmem:[%s387 + $0x2c] sm:$0xf]
        %v422 = vld [vmem:[%s387 + $0x30] sm:$0xf]
        %v423 = vld [vmem:[%s387 + $0x34] sm:$0xf]
        %v424 = vld [vmem:[%s387 + $0x38] sm:$0xf]
        %v425 = vld [vmem:[%s387 + $0x3c] sm:$0xf]
        %v442 = vunpack.c.l.b16 %v394
        %v443 = vunpack.c.l.b16 %v395
        %v444 = vunpack.c.l.b16 %v396
        %v445 = vunpack.c.l.b16 %v397
        %v446 = vunpack.c.l.b16 %v398
        %v447 = vunpack.c.l.b16 %v399
        %v448 = vunpack.c.l.b16 %v400
        %v449 = vunpack.c.l.b16 %v401
        %v450 = vunpack.c.l.b16 %v402
        %v451 = vunpack.c.l.b16 %v403
        %v452 = vunpack.c.l.b16 %v404
        %v453 = vunpack.c.l.b16 %v405
        %v454 = vunpack.c.l.b16 %v406
        %v455 = vunpack.c.l.b16 %v407
        %v456 = vunpack.c.l.b16 %v408
        %v457 = vunpack.c.l.b16 %v409
        %v458 = vpack.c.b16 %v443, %v442
        %v459 = vpack.c.b16 %v445, %v444
        %v460 = vpack.c.b16 %v447, %v446
        %v461 = vpack.c.b16 %v449, %v448
        %v462 = vpack.c.b16 %v451, %v450
        %v463 = vpack.c.b16 %v453, %v452
        %v464 = vpack.c.b16 %v455, %v454
        %v465 = vpack.c.b16 %v457, %v456
        %v490 = vunpack.c.l.b16 %v410
        %v491 = vunpack.c.l.b16 %v411
        %v492 = vunpack.c.l.b16 %v412
        %v493 = vunpack.c.l.b16 %v413
        %v494 = vunpack.c.l.b16 %v414
        %v495 = vunpack.c.l.b16 %v415
        %v496 = vunpack.c.l.b16 %v416
        %v497 = vunpack.c.l.b16 %v417
        %v498 = vunpack.c.l.b16 %v418
        %v499 = vunpack.c.l.b16 %v419
        %v500 = vunpack.c.l.b16 %v420
        %v501 = vunpack.c.l.b16 %v421
        %v502 = vunpack.c.l.b16 %v422
        %v503 = vunpack.c.l.b16 %v423
        %v504 = vunpack.c.l.b16 %v424
        %v505 = vunpack.c.l.b16 %v425
        %v506 = vpack.c.b16 %v491, %v490
        %v507 = vpack.c.b16 %v493, %v492
        %v508 = vpack.c.b16 %v495, %v494
        %v509 = vpack.c.b16 %v497, %v496
        %v510 = vpack.c.b16 %v499, %v498
        %v511 = vpack.c.b16 %v501, %v500
        %v512 = vpack.c.b16 %v503, %v502
        %v513 = vpack.c.b16 %v505, %v504
        %522 = vmatpush.bf16.msra.mxu0 %v513
        %523 = vmatpush.bf16.msra.mxu0 %v512
        %524 = vmatpush.bf16.msra.mxu0 %v511
        %525 = vmatpush.bf16.msra.mxu0 %v510
        %526 = vmatpush.bf16.msra.mxu0 %v509
        %527 = vmatpush.bf16.msra.mxu0 %v508
        %528 = vmatpush.bf16.msra.mxu0 %v507
        %529 = vmatpush.bf16.msra.mxu0 %v506
        %530 = vmatmul.bf16.gmra.mxu0 %v458
        %v531 = vpop.f32.mrf.mxu0
        %v532 = vadd.f32 0.0, %v531
        %v533 = vpop.f32.mrf.mxu0
        %v534 = vadd.f32 0.0, %v533
        %535 = vmatmul.bf16.gmra.mxu0 %v459
        %v536 = vpop.f32.mrf.mxu0
        %v537 = vadd.f32 0.0, %v536
        %v538 = vpop.f32.mrf.mxu0
        %v539 = vadd.f32 0.0, %v538
        %540 = vmatmul.bf16.gmra.mxu0 %v460
        %v541 = vpop.f32.mrf.mxu0
        %v542 = vadd.f32 0.0, %v541
        %v543 = vpop.f32.mrf.mxu0
        %v544 = vadd.f32 0.0, %v543
        %545 = vmatmul.bf16.gmra.mxu0 %v461
        %v546 = vpop.f32.mrf.mxu0
        %v547 = vadd.f32 0.0, %v546
        %v548 = vpop.f32.mrf.mxu0
        %v549 = vadd.f32 0.0, %v548
        %550 = vmatmul.bf16.gmra.mxu0 %v462
        %v551 = vpop.f32.mrf.mxu0
        %v552 = vadd.f32 0.0, %v551
        %v553 = vpop.f32.mrf.mxu0
        %v554 = vadd.f32 0.0, %v553
        %555 = vmatmul.bf16.gmra.mxu0 %v463
        %v556 = vpop.f32.mrf.mxu0
        %v557 = vadd.f32 0.0, %v556
        %v558 = vpop.f32.mrf.mxu0
        %v559 = vadd.f32 0.0, %v558
        %560 = vmatmul.bf16.gmra.mxu0 %v464
        %v561 = vpop.f32.mrf.mxu0
        %v562 = vadd.f32 0.0, %v561
        %v563 = vpop.f32.mrf.mxu0
        %v564 = vadd.f32 0.0, %v563
        %565 = vmatmul.bf16.gmra.mxu0 %v465
        %v566 = vpop.f32.mrf.mxu0
        %v567 = vadd.f32 0.0, %v566
        %v568 = vpop.f32.mrf.mxu0
        %v569 = vadd.f32 0.0, %v568
        %570 = vdwg.mxu0
        %v571 = vpack.c.bf16 %v532, %v532
        %v572 = vpack.c.bf16 %v534, %v534
        %v573 = vpack.c.bf16 %v537, %v537
        %v574 = vpack.c.bf16 %v539, %v539
        %v575 = vpack.c.bf16 %v542, %v542
        %v576 = vpack.c.bf16 %v544, %v544
        %v577 = vpack.c.bf16 %v547, %v547
        %v578 = vpack.c.bf16 %v549, %v549
        %v579 = vpack.c.bf16 %v552, %v552
        %v580 = vpack.c.bf16 %v554, %v554
        %v581 = vpack.c.bf16 %v557, %v557
        %v582 = vpack.c.bf16 %v559, %v559
        %v583 = vpack.c.bf16 %v562, %v562
        %v584 = vpack.c.bf16 %v564, %v564
        %v585 = vpack.c.bf16 %v567, %v567
        %v586 = vpack.c.bf16 %v569, %v569
        %v603 = vunpack.c.l.b16 %v571
        %v604 = vunpack.c.l.b16 %v572
        %v605 = vunpack.c.l.b16 %v573
        %v606 = vunpack.c.l.b16 %v574
        %v607 = vunpack.c.l.b16 %v575
        %v608 = vunpack.c.l.b16 %v576
        %v609 = vunpack.c.l.b16 %v577
        %v610 = vunpack.c.l.b16 %v578
        %v611 = vunpack.c.l.b16 %v579
        %v612 = vunpack.c.l.b16 %v580
        %v613 = vunpack.c.l.b16 %v581
        %v614 = vunpack.c.l.b16 %v582
        %v615 = vunpack.c.l.b16 %v583
        %v616 = vunpack.c.l.b16 %v584
        %v617 = vunpack.c.l.b16 %v585
        %v618 = vunpack.c.l.b16 %v586
        %v619 = vpack.c.b16 %v604, %v603
        %v620 = vpack.c.b16 %v606, %v605
        %v621 = vpack.c.b16 %v608, %v607
        %v622 = vpack.c.b16 %v610, %v609
        %v623 = vpack.c.b16 %v612, %v611
        %v624 = vpack.c.b16 %v614, %v613
        %v625 = vpack.c.b16 %v616, %v615
        %v626 = vpack.c.b16 %v618, %v617
        %635 = vmatpush.bf16.msra.mxu0 %v626
        %636 = vmatpush.bf16.msra.mxu0 %v625
        %637 = vmatpush.bf16.msra.mxu0 %v624
        %638 = vmatpush.bf16.msra.mxu0 %v623
        %639 = vmatpush.bf16.msra.mxu0 %v622
        %640 = vmatpush.bf16.msra.mxu0 %v621
        %641 = vmatpush.bf16.msra.mxu0 %v620
        %642 = vmatpush.bf16.msra.mxu0 %v619
        %643 = vmatmul.bf16.gmra.mxu0 %v458
        %v644 = vpop.f32.mrf.mxu0
        %v645 = vadd.f32 0.0, %v644
        %v646 = vpop.f32.mrf.mxu0
        %v647 = vadd.f32 0.0, %v646
        %648 = vmatmul.bf16.gmra.mxu0 %v459
        %v649 = vpop.f32.mrf.mxu0
        %v650 = vadd.f32 0.0, %v649
        %v651 = vpop.f32.mrf.mxu0
        %v652 = vadd.f32 0.0, %v651
        %653 = vmatmul.bf16.gmra.mxu0 %v460
        %v654 = vpop.f32.mrf.mxu0
        %v655 = vadd.f32 0.0, %v654
        %v656 = vpop.f32.mrf.mxu0
        %v657 = vadd.f32 0.0, %v656
        %658 = vmatmul.bf16.gmra.mxu0 %v461
        %v659 = vpop.f32.mrf.mxu0
        %v660 = vadd.f32 0.0, %v659
        %v661 = vpop.f32.mrf.mxu0
        %v662 = vadd.f32 0.0, %v661
        %663 = vmatmul.bf16.gmra.mxu0 %v462
        %v664 = vpop.f32.mrf.mxu0
        %v665 = vadd.f32 0.0, %v664
        %v666 = vpop.f32.mrf.mxu0
        %v667 = vadd.f32 0.0, %v666
        %668 = vmatmul.bf16.gmra.mxu0 %v463
        %v669 = vpop.f32.mrf.mxu0
        %v670 = vadd.f32 0.0, %v669
        %v671 = vpop.f32.mrf.mxu0
        %v672 = vadd.f32 0.0, %v671
        %673 = vmatmul.bf16.gmra.mxu0 %v464
        %v674 = vpop.f32.mrf.mxu0
        %v675 = vadd.f32 0.0, %v674
        %v676 = vpop.f32.mrf.mxu0
        %v677 = vadd.f32 0.0, %v676
        %678 = vmatmul.bf16.gmra.mxu0 %v465
        %v679 = vpop.f32.mrf.mxu0
        %v680 = vadd.f32 0.0, %v679
        %v681 = vpop.f32.mrf.mxu0
        %v682 = vadd.f32 0.0, %v681
        %683 = vdwg.mxu0
        %v684 = vpack.c.bf16 %v645, %v645
        %v685 = vpack.c.bf16 %v647, %v647
        %v686 = vpack.c.bf16 %v650, %v650
        %v687 = vpack.c.bf16 %v652, %v652
        %v688 = vpack.c.bf16 %v655, %v655
        %v689 = vpack.c.bf16 %v657, %v657
        %v690 = vpack.c.bf16 %v660, %v660
        %v691 = vpack.c.bf16 %v662, %v662
        %v692 = vpack.c.bf16 %v665, %v665
        %v693 = vpack.c.bf16 %v667, %v667
        %v694 = vpack.c.bf16 %v670, %v670
        %v695 = vpack.c.bf16 %v672, %v672
        %v696 = vpack.c.bf16 %v675, %v675
        %v697 = vpack.c.bf16 %v677, %v677
        %v698 = vpack.c.bf16 %v680, %v680
        %v699 = vpack.c.bf16 %v682, %v682
        %700 = vrot.lane.b32.xlu0 %v619, 16
        %v701 = vpop.permute.xlu0 %700
        %702 = vrot.lane.b32.xlu0 %v620, 16
        %v703 = vpop.permute.xlu0 %702
        %704 = vrot.lane.b32.xlu0 %v621, 16
        %v705 = vpop.permute.xlu0 %704
        %706 = vrot.lane.b32.xlu0 %v622, 16
        %v707 = vpop.permute.xlu0 %706
        %708 = vrot.lane.b32.xlu0 %v623, 16
        %v709 = vpop.permute.xlu0 %708
        %710 = vrot.lane.b32.xlu0 %v624, 16
        %v711 = vpop.permute.xlu0 %710
        %712 = vrot.lane.b32.xlu0 %v625, 16
        %v713 = vpop.permute.xlu0 %712
        %714 = vrot.lane.b32.xlu0 %v626, 16
        %v715 = vpop.permute.xlu0 %714
        %v732 = vunpack.c.l.b16 %v684
        %v733 = vunpack.c.l.b16 %v685
        %v734 = vunpack.c.l.b16 %v686
        %v735 = vunpack.c.l.b16 %v687
        %v736 = vunpack.c.l.b16 %v688
        %v737 = vunpack.c.l.b16 %v689
        %v738 = vunpack.c.l.b16 %v690
        %v739 = vunpack.c.l.b16 %v691
        %v740 = vunpack.c.l.b16 %v692
        %v741 = vunpack.c.l.b16 %v693
        %v742 = vunpack.c.l.b16 %v694
        %v743 = vunpack.c.l.b16 %v695
        %v744 = vunpack.c.l.b16 %v696
        %v745 = vunpack.c.l.b16 %v697
        %v746 = vunpack.c.l.b16 %v698
        %v747 = vunpack.c.l.b16 %v699
        %v748 = vpack.c.b16 %v733, %v732
        %v749 = vpack.c.b16 %v735, %v734
        %v750 = vpack.c.b16 %v737, %v736
        %v751 = vpack.c.b16 %v739, %v738
        %v752 = vpack.c.b16 %v741, %v740
        %v753 = vpack.c.b16 %v743, %v742
        %v754 = vpack.c.b16 %v745, %v744
        %v755 = vpack.c.b16 %v747, %v746
        %756 = vrot.lane.b32.xlu0 %v748, 32
        %v757 = vpop.permute.xlu0 %756
        %758 = vrot.lane.b32.xlu0 %v749, 32
        %v759 = vpop.permute.xlu0 %758
        %760 = vrot.lane.b32.xlu0 %v750, 32
        %v761 = vpop.permute.xlu0 %760
        %762 = vrot.lane.b32.xlu0 %v751, 32
        %v763 = vpop.permute.xlu0 %762
        %764 = vrot.lane.b32.xlu0 %v752, 32
        %v765 = vpop.permute.xlu0 %764
        %766 = vrot.lane.b32.xlu0 %v753, 32
        %v767 = vpop.permute.xlu0 %766
        %768 = vrot.lane.b32.xlu0 %v754, 32
        %v769 = vpop.permute.xlu0 %768
        %770 = vrot.lane.b32.xlu0 %v755, 32
        %v771 = vpop.permute.xlu0 %770
        %vm772 = vcmask 130048
        %v775 = vsel %vm772, %v506, %v701
        %v778 = vsel %vm772, %v507, %v703
        %v781 = vsel %vm772, %v508, %v705
        %v784 = vsel %vm772, %v509, %v707
        %v787 = vsel %vm772, %v510, %v709
        %v790 = vsel %vm772, %v511, %v711
        %v793 = vsel %vm772, %v512, %v713
        %v796 = vsel %vm772, %v513, %v715
        %vm797 = vcmask 261120
        %v799 = vsel %vm797, %v775, %v757
        %v801 = vsel %vm797, %v778, %v759
        %v803 = vsel %vm797, %v781, %v761
        %v805 = vsel %vm797, %v784, %v763
        %v807 = vsel %vm797, %v787, %v765
        %v809 = vsel %vm797, %v790, %v767
        %v811 = vsel %vm797, %v793, %v769
        %v813 = vsel %vm797, %v796, %v771
        %v814 = vld [vmem:[%s3] sm:$0xf]
        %v815 = vld [vmem:[%s3 + $0x4] sm:$0xf]
        %v816 = vld [vmem:[%s3 + $0x8] sm:$0xf]
        %v817 = vld [vmem:[%s3 + $0xc] sm:$0xf]
        %v818 = vld [vmem:[%s3 + $0x10] sm:$0xf]
        %v819 = vld [vmem:[%s3 + $0x14] sm:$0xf]
        %v820 = vld [vmem:[%s4] sm:$0x1]
        %v822 = vperm.slane %v820, 0
        %v830 = vunpack.c.l.b16 %v814
        %v831 = vunpack.c.l.b16 %v815
        %v832 = vunpack.c.l.b16 %v816
        %v833 = vunpack.c.l.b16 %v817
        %v834 = vunpack.c.l.b16 %v818
        %v835 = vunpack.c.l.b16 %v819
        %v836 = vpack.c.b16 %v831, %v830
        %v837 = vpack.c.b16 %v833, %v832
        %v838 = vpack.c.b16 %v835, %v834
        %vm842 = vcmask 392192
        %v843 = vsel %vm842, %v799, 0
        %v845 = vsel %vm842, %v801, 0
        %v847 = vsel %vm842, %v803, 0
        %v849 = vsel %vm842, %v805, 0
        %v851 = vsel %vm842, %v807, 0
        %v853 = vsel %vm842, %v809, 0
        %v855 = vsel %vm842, %v811, 0
        %v857 = vsel %vm842, %v813, 0
        %859 = vmatpush.bf16.msra.mxu0 0
        %860 = vmatpush.bf16.msra.mxu0 0
        %861 = vmatpush.bf16.msra.mxu0 0
        %862 = vmatpush.bf16.msra.mxu0 0
        %863 = vmatpush.bf16.msra.mxu0 0
        %864 = vmatpush.bf16.msra.mxu0 %v838
        %865 = vmatpush.bf16.msra.mxu0 %v837
        %866 = vmatpush.bf16.msra.mxu0 %v836
        %867 = vmatmul.bf16.gmra.mxu0 %v843
        %v868 = vpop.f32.mrf.mxu0
        %v869 = vadd.f32 %v822, %v868
        %v870 = vpop.f32.mrf.mxu0
        %v871 = vadd.f32 %v822, %v870
        %872 = vmatmul.bf16.gmra.mxu0 %v845
        %v873 = vpop.f32.mrf.mxu0
        %v874 = vadd.f32 %v822, %v873
        %v875 = vpop.f32.mrf.mxu0
        %v876 = vadd.f32 %v822, %v875
        %877 = vmatmul.bf16.gmra.mxu0 %v847
        %v878 = vpop.f32.mrf.mxu0
        %v879 = vadd.f32 %v822, %v878
        %v880 = vpop.f32.mrf.mxu0
        %v881 = vadd.f32 %v822, %v880
        %882 = vmatmul.bf16.gmra.mxu0 %v849
        %v883 = vpop.f32.mrf.mxu0
        %v884 = vadd.f32 %v822, %v883
        %v885 = vpop.f32.mrf.mxu0
        %v886 = vadd.f32 %v822, %v885
        %887 = vmatmul.bf16.gmra.mxu0 %v851
        %v888 = vpop.f32.mrf.mxu0
        %v889 = vadd.f32 %v822, %v888
        %v890 = vpop.f32.mrf.mxu0
        %v891 = vadd.f32 %v822, %v890
        %892 = vmatmul.bf16.gmra.mxu0 %v853
        %v893 = vpop.f32.mrf.mxu0
        %v894 = vadd.f32 %v822, %v893
        %v895 = vpop.f32.mrf.mxu0
        %v896 = vadd.f32 %v822, %v895
        %897 = vmatmul.bf16.gmra.mxu0 %v855
        %v898 = vpop.f32.mrf.mxu0
        %v899 = vadd.f32 %v822, %v898
        %v900 = vpop.f32.mrf.mxu0
        %v901 = vadd.f32 %v822, %v900
        %902 = vmatmul.bf16.gmra.mxu0 %v857
        %v903 = vpop.f32.mrf.mxu0
        %v904 = vadd.f32 %v822, %v903
        %v905 = vpop.f32.mrf.mxu0
        %v906 = vadd.f32 %v822, %v905
        %907 = vdwg.mxu0
        %v908 = vmax.f32 %v869, 0.0
        %v909 = vmax.f32 %v871, 0.0
        %v910 = vmax.f32 %v874, 0.0
        %v911 = vmax.f32 %v876, 0.0
        %v912 = vmax.f32 %v879, 0.0
        %v913 = vmax.f32 %v881, 0.0
        %v914 = vmax.f32 %v884, 0.0
        %v915 = vmax.f32 %v886, 0.0
        %v916 = vmax.f32 %v889, 0.0
        %v917 = vmax.f32 %v891, 0.0
        %v918 = vmax.f32 %v894, 0.0
        %v919 = vmax.f32 %v896, 0.0
        %v920 = vmax.f32 %v899, 0.0
        %v921 = vmax.f32 %v901, 0.0
        %v922 = vmax.f32 %v904, 0.0
        %v923 = vmax.f32 %v906, 0.0
        %v924 = vpack.c.bf16 %v908, %v908
        %v925 = vpack.c.bf16 %v909, %v909
        %v926 = vpack.c.bf16 %v910, %v910
        %v927 = vpack.c.bf16 %v911, %v911
        %v928 = vpack.c.bf16 %v912, %v912
        %v929 = vpack.c.bf16 %v913, %v913
        %v930 = vpack.c.bf16 %v914, %v914
        %v931 = vpack.c.bf16 %v915, %v915
        %v932 = vpack.c.bf16 %v916, %v916
        %v933 = vpack.c.bf16 %v917, %v917
        %v934 = vpack.c.bf16 %v918, %v918
        %v935 = vpack.c.bf16 %v919, %v919
        %v936 = vpack.c.bf16 %v920, %v920
        %v937 = vpack.c.bf16 %v921, %v921
        %v938 = vpack.c.bf16 %v922, %v922
        %v939 = vpack.c.bf16 %v923, %v923
        %v956 = vunpack.c.l.b16 %v924
        %v957 = vunpack.c.l.b16 %v925
        %v958 = vunpack.c.l.b16 %v926
        %v959 = vunpack.c.l.b16 %v927
        %v960 = vunpack.c.l.b16 %v928
        %v961 = vunpack.c.l.b16 %v929
        %v962 = vunpack.c.l.b16 %v930
        %v963 = vunpack.c.l.b16 %v931
        %v964 = vunpack.c.l.b16 %v932
        %v965 = vunpack.c.l.b16 %v933
        %v966 = vunpack.c.l.b16 %v934
        %v967 = vunpack.c.l.b16 %v935
        %v968 = vunpack.c.l.b16 %v936
        %v969 = vunpack.c.l.b16 %v937
        %v970 = vunpack.c.l.b16 %v938
        %v971 = vunpack.c.l.b16 %v939
        %v972 = vpack.c.b16 %v957, %v956
        %v973 = vpack.c.b16 %v959, %v958
        %v974 = vpack.c.b16 %v961, %v960
        %v975 = vpack.c.b16 %v963, %v962
        %v976 = vpack.c.b16 %v965, %v964
        %v977 = vpack.c.b16 %v967, %v966
        %v978 = vpack.c.b16 %v969, %v968
        %v979 = vpack.c.b16 %v971, %v970
        %988 = vmatpush.bf16.msra.mxu0 %v979
        %989 = vmatpush.bf16.msra.mxu0 %v978
        %990 = vmatpush.bf16.msra.mxu0 %v977
        %991 = vmatpush.bf16.msra.mxu0 %v976
        %992 = vmatpush.bf16.msra.mxu0 %v975
        %993 = vmatpush.bf16.msra.mxu0 %v974
        %994 = vmatpush.bf16.msra.mxu0 %v973
        %995 = vmatpush.bf16.msra.mxu0 %v972
        %996 = vmatmul.bf16.gmra.mxu0 %v458
        %v997 = vpop.f32.mrf.mxu0
        %v998 = vadd.f32 0.0, %v997
        %v999 = vpop.f32.mrf.mxu0
        %v1000 = vadd.f32 0.0, %v999
        %1001 = vmatmul.bf16.gmra.mxu0 %v459
        %v1002 = vpop.f32.mrf.mxu0
        %v1003 = vadd.f32 0.0, %v1002
        %v1004 = vpop.f32.mrf.mxu0
        %v1005 = vadd.f32 0.0, %v1004
        %1006 = vmatmul.bf16.gmra.mxu0 %v460
        %v1007 = vpop.f32.mrf.mxu0
        %v1008 = vadd.f32 0.0, %v1007
        %v1009 = vpop.f32.mrf.mxu0
        %v1010 = vadd.f32 0.0, %v1009
        %1011 = vmatmul.bf16.gmra.mxu0 %v461
        %v1012 = vpop.f32.mrf.mxu0
        %v1013 = vadd.f32 0.0, %v1012
        %v1014 = vpop.f32.mrf.mxu0
        %v1015 = vadd.f32 0.0, %v1014
        %1016 = vmatmul.bf16.gmra.mxu0 %v462
        %v1017 = vpop.f32.mrf.mxu0
        %v1018 = vadd.f32 0.0, %v1017
        %v1019 = vpop.f32.mrf.mxu0
        %v1020 = vadd.f32 0.0, %v1019
        %1021 = vmatmul.bf16.gmra.mxu0 %v463
        %v1022 = vpop.f32.mrf.mxu0
        %v1023 = vadd.f32 0.0, %v1022
        %v1024 = vpop.f32.mrf.mxu0
        %v1025 = vadd.f32 0.0, %v1024
        %1026 = vmatmul.bf16.gmra.mxu0 %v464
        %v1027 = vpop.f32.mrf.mxu0
        %v1028 = vadd.f32 0.0, %v1027
        %v1029 = vpop.f32.mrf.mxu0
        %v1030 = vadd.f32 0.0, %v1029
        %1031 = vmatmul.bf16.gmra.mxu0 %v465
        %v1032 = vpop.f32.mrf.mxu0
        %v1033 = vadd.f32 0.0, %v1032
        %v1034 = vpop.f32.mrf.mxu0
        %v1035 = vadd.f32 0.0, %v1034
        %1036 = vdwg.mxu0
        %v1037 = vpack.c.bf16 %v998, %v998
        %v1038 = vpack.c.bf16 %v1000, %v1000
        %v1039 = vpack.c.bf16 %v1003, %v1003
        %v1040 = vpack.c.bf16 %v1005, %v1005
        %v1041 = vpack.c.bf16 %v1008, %v1008
        %v1042 = vpack.c.bf16 %v1010, %v1010
        %v1043 = vpack.c.bf16 %v1013, %v1013
        %v1044 = vpack.c.bf16 %v1015, %v1015
        %v1045 = vpack.c.bf16 %v1018, %v1018
        %v1046 = vpack.c.bf16 %v1020, %v1020
        %v1047 = vpack.c.bf16 %v1023, %v1023
        %v1048 = vpack.c.bf16 %v1025, %v1025
        %v1049 = vpack.c.bf16 %v1028, %v1028
        %v1050 = vpack.c.bf16 %v1030, %v1030
        %v1051 = vpack.c.bf16 %v1033, %v1033
        %v1052 = vpack.c.bf16 %v1035, %v1035
        %v1069 = vunpack.c.l.b16 %v1037
        %v1070 = vunpack.c.l.b16 %v1038
        %v1071 = vunpack.c.l.b16 %v1039
        %v1072 = vunpack.c.l.b16 %v1040
        %v1073 = vunpack.c.l.b16 %v1041
        %v1074 = vunpack.c.l.b16 %v1042
        %v1075 = vunpack.c.l.b16 %v1043
        %v1076 = vunpack.c.l.b16 %v1044
        %v1077 = vunpack.c.l.b16 %v1045
        %v1078 = vunpack.c.l.b16 %v1046
        %v1079 = vunpack.c.l.b16 %v1047
        %v1080 = vunpack.c.l.b16 %v1048
        %v1081 = vunpack.c.l.b16 %v1049
        %v1082 = vunpack.c.l.b16 %v1050
        %v1083 = vunpack.c.l.b16 %v1051
        %v1084 = vunpack.c.l.b16 %v1052
        %v1085 = vpack.c.b16 %v1070, %v1069
        %v1086 = vpack.c.b16 %v1072, %v1071
        %v1087 = vpack.c.b16 %v1074, %v1073
        %v1088 = vpack.c.b16 %v1076, %v1075
        %v1089 = vpack.c.b16 %v1078, %v1077
        %v1090 = vpack.c.b16 %v1080, %v1079
        %v1091 = vpack.c.b16 %v1082, %v1081
        %v1092 = vpack.c.b16 %v1084, %v1083
        %1101 = vmatpush.bf16.msra.mxu0 %v1092
        %1102 = vmatpush.bf16.msra.mxu0 %v1091
        %1103 = vmatpush.bf16.msra.mxu0 %v1090
        %1104 = vmatpush.bf16.msra.mxu0 %v1089
        %1105 = vmatpush.bf16.msra.mxu0 %v1088
        %1106 = vmatpush.bf16.msra.mxu0 %v1087
        %1107 = vmatpush.bf16.msra.mxu0 %v1086
        %1108 = vmatpush.bf16.msra.mxu0 %v1085
        %1109 = vmatmul.bf16.gmra.mxu0 %v458
        %v1110 = vpop.f32.mrf.mxu0
        %v1111 = vadd.f32 0.0, %v1110
        %v1112 = vpop.f32.mrf.mxu0
        %v1113 = vadd.f32 0.0, %v1112
        %1114 = vmatmul.bf16.gmra.mxu0 %v459
        %v1115 = vpop.f32.mrf.mxu0
        %v1116 = vadd.f32 0.0, %v1115
        %v1117 = vpop.f32.mrf.mxu0
        %v1118 = vadd.f32 0.0, %v1117
        %1119 = vmatmul.bf16.gmra.mxu0 %v460
        %v1120 = vpop.f32.mrf.mxu0
        %v1121 = vadd.f32 0.0, %v1120
        %v1122 = vpop.f32.mrf.mxu0
        %v1123 = vadd.f32 0.0, %v1122
        %1124 = vmatmul.bf16.gmra.mxu0 %v461
        %v1125 = vpop.f32.mrf.mxu0
        %v1126 = vadd.f32 0.0, %v1125
        %v1127 = vpop.f32.mrf.mxu0
        %v1128 = vadd.f32 0.0, %v1127
        %1129 = vmatmul.bf16.gmra.mxu0 %v462
        %v1130 = vpop.f32.mrf.mxu0
        %v1131 = vadd.f32 0.0, %v1130
        %v1132 = vpop.f32.mrf.mxu0
        %v1133 = vadd.f32 0.0, %v1132
        %1134 = vmatmul.bf16.gmra.mxu0 %v463
        %v1135 = vpop.f32.mrf.mxu0
        %v1136 = vadd.f32 0.0, %v1135
        %v1137 = vpop.f32.mrf.mxu0
        %v1138 = vadd.f32 0.0, %v1137
        %1139 = vmatmul.bf16.gmra.mxu0 %v464
        %v1140 = vpop.f32.mrf.mxu0
        %v1141 = vadd.f32 0.0, %v1140
        %v1142 = vpop.f32.mrf.mxu0
        %v1143 = vadd.f32 0.0, %v1142
        %1144 = vmatmul.bf16.gmra.mxu0 %v465
        %v1145 = vpop.f32.mrf.mxu0
        %v1146 = vadd.f32 0.0, %v1145
        %v1147 = vpop.f32.mrf.mxu0
        %v1148 = vadd.f32 0.0, %v1147
        %1149 = vdwg.mxu0
        %v1150 = vpack.c.bf16 %v1111, %v1111
        %v1151 = vpack.c.bf16 %v1113, %v1113
        %v1152 = vpack.c.bf16 %v1116, %v1116
        %v1153 = vpack.c.bf16 %v1118, %v1118
        %v1154 = vpack.c.bf16 %v1121, %v1121
        %v1155 = vpack.c.bf16 %v1123, %v1123
        %v1156 = vpack.c.bf16 %v1126, %v1126
        %v1157 = vpack.c.bf16 %v1128, %v1128
        %v1158 = vpack.c.bf16 %v1131, %v1131
        %v1159 = vpack.c.bf16 %v1133, %v1133
        %v1160 = vpack.c.bf16 %v1136, %v1136
        %v1161 = vpack.c.bf16 %v1138, %v1138
        %v1162 = vpack.c.bf16 %v1141, %v1141
        %v1163 = vpack.c.bf16 %v1143, %v1143
        %v1164 = vpack.c.bf16 %v1146, %v1146
        %v1165 = vpack.c.bf16 %v1148, %v1148
        %1166 = vrot.lane.b32.xlu0 %v1085, 12
        %v1167 = vpop.permute.xlu0 %1166
        %1168 = vrot.lane.b32.xlu0 %v1086, 12
        %v1169 = vpop.permute.xlu0 %1168
        %1170 = vrot.lane.b32.xlu0 %v1087, 12
        %v1171 = vpop.permute.xlu0 %1170
        %1172 = vrot.lane.b32.xlu0 %v1088, 12
        %v1173 = vpop.permute.xlu0 %1172
        %1174 = vrot.lane.b32.xlu0 %v1089, 12
        %v1175 = vpop.permute.xlu0 %1174
        %1176 = vrot.lane.b32.xlu0 %v1090, 12
        %v1177 = vpop.permute.xlu0 %1176
        %1178 = vrot.lane.b32.xlu0 %v1091, 12
        %v1179 = vpop.permute.xlu0 %1178
        %1180 = vrot.lane.b32.xlu0 %v1092, 12
        %v1181 = vpop.permute.xlu0 %1180
        %v1198 = vunpack.c.l.b16 %v1150
        %v1199 = vunpack.c.l.b16 %v1151
        %v1200 = vunpack.c.l.b16 %v1152
        %v1201 = vunpack.c.l.b16 %v1153
        %v1202 = vunpack.c.l.b16 %v1154
        %v1203 = vunpack.c.l.b16 %v1155
        %v1204 = vunpack.c.l.b16 %v1156
        %v1205 = vunpack.c.l.b16 %v1157
        %v1206 = vunpack.c.l.b16 %v1158
        %v1207 = vunpack.c.l.b16 %v1159
        %v1208 = vunpack.c.l.b16 %v1160
        %v1209 = vunpack.c.l.b16 %v1161
        %v1210 = vunpack.c.l.b16 %v1162
        %v1211 = vunpack.c.l.b16 %v1163
        %v1212 = vunpack.c.l.b16 %v1164
        %v1213 = vunpack.c.l.b16 %v1165
        %v1214 = vpack.c.b16 %v1199, %v1198
        %v1215 = vpack.c.b16 %v1201, %v1200
        %v1216 = vpack.c.b16 %v1203, %v1202
        %v1217 = vpack.c.b16 %v1205, %v1204
        %v1218 = vpack.c.b16 %v1207, %v1206
        %v1219 = vpack.c.b16 %v1209, %v1208
        %v1220 = vpack.c.b16 %v1211, %v1210
        %v1221 = vpack.c.b16 %v1213, %v1212
        %1222 = vrot.lane.b32.xlu0 %v1214, 24
        %v1223 = vpop.permute.xlu0 %1222
        %1224 = vrot.lane.b32.xlu0 %v1215, 24
        %v1225 = vpop.permute.xlu0 %1224
        %1226 = vrot.lane.b32.xlu0 %v1216, 24
        %v1227 = vpop.permute.xlu0 %1226
        %1228 = vrot.lane.b32.xlu0 %v1217, 24
        %v1229 = vpop.permute.xlu0 %1228
        %1230 = vrot.lane.b32.xlu0 %v1218, 24
        %v1231 = vpop.permute.xlu0 %1230
        %1232 = vrot.lane.b32.xlu0 %v1219, 24
        %v1233 = vpop.permute.xlu0 %1232
        %1234 = vrot.lane.b32.xlu0 %v1220, 24
        %v1235 = vpop.permute.xlu0 %1234
        %1236 = vrot.lane.b32.xlu0 %v1221, 24
        %v1237 = vpop.permute.xlu0 %1236
        %vm1238 = vcmask 97280
        %v1241 = vsel %vm1238, %v972, %v1167
        %v1244 = vsel %vm1238, %v973, %v1169
        %v1247 = vsel %vm1238, %v974, %v1171
        %v1250 = vsel %vm1238, %v975, %v1173
        %v1253 = vsel %vm1238, %v976, %v1175
        %v1256 = vsel %vm1238, %v977, %v1177
        %v1259 = vsel %vm1238, %v978, %v1179
        %v1262 = vsel %vm1238, %v979, %v1181
        %vm1263 = vcmask 195584
        %v1265 = vsel %vm1263, %v1241, %v1223
        %v1267 = vsel %vm1263, %v1244, %v1225
        %v1269 = vsel %vm1263, %v1247, %v1227
        %v1271 = vsel %vm1263, %v1250, %v1229
        %v1273 = vsel %vm1263, %v1253, %v1231
        %v1275 = vsel %vm1263, %v1256, %v1233
        %v1277 = vsel %vm1263, %v1259, %v1235
        %v1279 = vsel %vm1263, %v1262, %v1237
        %v1280 = vld [vmem:[%s5] sm:$0xf]
        %v1281 = vld [vmem:[%s5 + $0x4] sm:$0xf]
        %v1282 = vld [vmem:[%s5 + $0x8] sm:$0xf]
        %v1283 = vld [vmem:[%s5 + $0xc] sm:$0xf]
        %v1284 = vld [vmem:[%s5 + $0x10] sm:$0x3]
        %v1285 = vld [vmem:[%s6] sm:$0x1]
        %v1287 = vperm.slane %v1285, 0
        %v1294 = vunpack.c.l.b16 %v1280
        %v1295 = vunpack.c.l.b16 %v1281
        %v1296 = vunpack.c.l.b16 %v1282
        %v1297 = vunpack.c.l.b16 %v1283
        %v1298 = vunpack.c.l.b16 %v1284
        %v1299 = vpack.c.b16 %v1295, %v1294
        %v1300 = vpack.c.b16 %v1297, %v1296
        %v1301 = vpack.c.b16 %v1298, %v1298
        %vm1304 = vcmask 293888
        %v1305 = vsel %vm1304, %v1265, 0
        %v1307 = vsel %vm1304, %v1267, 0
        %v1309 = vsel %vm1304, %v1269, 0
        %v1311 = vsel %vm1304, %v1271, 0
        %v1313 = vsel %vm1304, %v1273, 0
        %v1315 = vsel %vm1304, %v1275, 0
        %v1317 = vsel %vm1304, %v1277, 0
        %v1319 = vsel %vm1304, %v1279, 0
        %vm1321 = vcmask 1041408
        %v1323 = vsel %vm1321, %v1301, 0
        %1325 = vmatpush.bf16.msra.mxu0 0
        %1326 = vmatpush.bf16.msra.mxu0 0
        %1327 = vmatpush.bf16.msra.mxu0 0
        %1328 = vmatpush.bf16.msra.mxu0 0
        %1329 = vmatpush.bf16.msra.mxu0 0
        %1330 = vmatpush.bf16.msra.mxu0 %v1323
        %1331 = vmatpush.bf16.msra.mxu0 %v1300
        %1332 = vmatpush.bf16.msra.mxu0 %v1299
        %1333 = vmatmul.bf16.gmra.mxu0 %v1305
        %v1334 = vpop.f32.mrf.mxu0
        %v1335 = vadd.f32 %v1287, %v1334
        %v1336 = vpop.f32.mrf.mxu0
        %v1337 = vadd.f32 %v1287, %v1336
        %1338 = vmatmul.bf16.gmra.mxu0 %v1307
        %v1339 = vpop.f32.mrf.mxu0
        %v1340 = vadd.f32 %v1287, %v1339
        %v1341 = vpop.f32.mrf.mxu0
        %v1342 = vadd.f32 %v1287, %v1341
        %1343 = vmatmul.bf16.gmra.mxu0 %v1309
        %v1344 = vpop.f32.mrf.mxu0
        %v1345 = vadd.f32 %v1287, %v1344
        %v1346 = vpop.f32.mrf.mxu0
        %v1347 = vadd.f32 %v1287, %v1346
        %1348 = vmatmul.bf16.gmra.mxu0 %v1311
        %v1349 = vpop.f32.mrf.mxu0
        %v1350 = vadd.f32 %v1287, %v1349
        %v1351 = vpop.f32.mrf.mxu0
        %v1352 = vadd.f32 %v1287, %v1351
        %1353 = vmatmul.bf16.gmra.mxu0 %v1313
        %v1354 = vpop.f32.mrf.mxu0
        %v1355 = vadd.f32 %v1287, %v1354
        %v1356 = vpop.f32.mrf.mxu0
        %v1357 = vadd.f32 %v1287, %v1356
        %1358 = vmatmul.bf16.gmra.mxu0 %v1315
        %v1359 = vpop.f32.mrf.mxu0
        %v1360 = vadd.f32 %v1287, %v1359
        %v1361 = vpop.f32.mrf.mxu0
        %v1362 = vadd.f32 %v1287, %v1361
        %1363 = vmatmul.bf16.gmra.mxu0 %v1317
        %v1364 = vpop.f32.mrf.mxu0
        %v1365 = vadd.f32 %v1287, %v1364
        %v1366 = vpop.f32.mrf.mxu0
        %v1367 = vadd.f32 %v1287, %v1366
        %1368 = vmatmul.bf16.gmra.mxu0 %v1319
        %v1369 = vpop.f32.mrf.mxu0
        %v1370 = vadd.f32 %v1287, %v1369
        %v1371 = vpop.f32.mrf.mxu0
        %v1372 = vadd.f32 %v1287, %v1371
        %1373 = vdwg.mxu0
        %v1374 = vmax.f32 %v1335, 0.0
        %v1375 = vmax.f32 %v1337, 0.0
        %v1376 = vmax.f32 %v1340, 0.0
        %v1377 = vmax.f32 %v1342, 0.0
        %v1378 = vmax.f32 %v1345, 0.0
        %v1379 = vmax.f32 %v1347, 0.0
        %v1380 = vmax.f32 %v1350, 0.0
        %v1381 = vmax.f32 %v1352, 0.0
        %v1382 = vmax.f32 %v1355, 0.0
        %v1383 = vmax.f32 %v1357, 0.0
        %v1384 = vmax.f32 %v1360, 0.0
        %v1385 = vmax.f32 %v1362, 0.0
        %v1386 = vmax.f32 %v1365, 0.0
        %v1387 = vmax.f32 %v1367, 0.0
        %v1388 = vmax.f32 %v1370, 0.0
        %v1389 = vmax.f32 %v1372, 0.0
        %v1390 = vpack.c.bf16 %v1375, %v1374
        %v1391 = vpack.c.bf16 %v1377, %v1376
        %v1392 = vpack.c.bf16 %v1379, %v1378
        %v1393 = vpack.c.bf16 %v1381, %v1380
        %v1394 = vpack.c.bf16 %v1383, %v1382
        %v1395 = vpack.c.bf16 %v1385, %v1384
        %v1396 = vpack.c.bf16 %v1387, %v1386
        %v1397 = vpack.c.bf16 %v1389, %v1388
        %v1398 = vld [vmem:[%s7] sm:$0xf]
        %vm1399 = vcmask 64512
        %v1401 = vsel %vm1399, %v1390, 0
        %v1404 = vsel %vm1399, %v1391, 0
        %v1407 = vsel %vm1399, %v1392, 0
        %v1410 = vsel %vm1399, %v1393, 0
        %v1413 = vsel %vm1399, %v1394, 0
        %v1416 = vsel %vm1399, %v1395, 0
        %v1419 = vsel %vm1399, %v1396, 0
        %v1422 = vsel %vm1399, %v1397, 0
        %vm1424 = vcmask 1043456
        %v1426 = vsel %vm1424, %v1398, 0
        %1428 = vmatpush.bf16.msra.mxu0 0
        %1429 = vmatpush.bf16.msra.mxu0 0
        %1430 = vmatpush.bf16.msra.mxu0 0
        %1431 = vmatpush.bf16.msra.mxu0 0
        %1432 = vmatpush.bf16.msra.mxu0 0
        %1433 = vmatpush.bf16.msra.mxu0 0
        %1434 = vmatpush.bf16.msra.mxu0 0
        %1435 = vmatpush.bf16.msra.mxu0 %v1426
        %1436 = vmatmul.bf16.gmra.mxu0 %v1401
        %v1437 = vpop.f32.mrf.mxu0
        %v1438 = vadd.f32 0.0, %v1437
        %v1439 = vpop.f32.mrf.mxu0
        %v1440 = vadd.f32 0.0, %v1439
        %1441 = vmatmul.bf16.gmra.mxu0 %v1404
        %v1442 = vpop.f32.mrf.mxu0
        %v1443 = vadd.f32 0.0, %v1442
        %v1444 = vpop.f32.mrf.mxu0
        %v1445 = vadd.f32 0.0, %v1444
        %1446 = vmatmul.bf16.gmra.mxu0 %v1407
        %v1447 = vpop.f32.mrf.mxu0
        %v1448 = vadd.f32 0.0, %v1447
        %v1449 = vpop.f32.mrf.mxu0
        %v1450 = vadd.f32 0.0, %v1449
        %1451 = vmatmul.bf16.gmra.mxu0 %v1410
        %v1452 = vpop.f32.mrf.mxu0
        %v1453 = vadd.f32 0.0, %v1452
        %v1454 = vpop.f32.mrf.mxu0
        %v1455 = vadd.f32 0.0, %v1454
        %1456 = vmatmul.bf16.gmra.mxu0 %v1413
        %v1457 = vpop.f32.mrf.mxu0
        %v1458 = vadd.f32 0.0, %v1457
        %v1459 = vpop.f32.mrf.mxu0
        %v1460 = vadd.f32 0.0, %v1459
        %1461 = vmatmul.bf16.gmra.mxu0 %v1416
        %v1462 = vpop.f32.mrf.mxu0
        %v1463 = vadd.f32 0.0, %v1462
        %v1464 = vpop.f32.mrf.mxu0
        %v1465 = vadd.f32 0.0, %v1464
        %1466 = vmatmul.bf16.gmra.mxu0 %v1419
        %v1467 = vpop.f32.mrf.mxu0
        %v1468 = vadd.f32 0.0, %v1467
        %v1469 = vpop.f32.mrf.mxu0
        %v1470 = vadd.f32 0.0, %v1469
        %1471 = vmatmul.bf16.gmra.mxu0 %v1422
        %v1472 = vpop.f32.mrf.mxu0
        %v1473 = vadd.f32 0.0, %v1472
        %v1474 = vpop.f32.mrf.mxu0
        %v1475 = vadd.f32 0.0, %v1474
        %1476 = vdwg.mxu0
        %v1477 = vpack.c.bf16 %v1440, %v1438
        %v1478 = vpack.c.bf16 %v1445, %v1443
        %v1479 = vpack.c.bf16 %v1450, %v1448
        %v1480 = vpack.c.bf16 %v1455, %v1453
        %v1481 = vpack.c.bf16 %v1460, %v1458
        %v1482 = vpack.c.bf16 %v1465, %v1463
        %v1483 = vpack.c.bf16 %v1470, %v1468
        %v1484 = vpack.c.bf16 %v1475, %v1473
        %v1485 = vld [vmem:[%s337] sm:$0xf]
        %v1486 = vld [vmem:[%s337 + $0x4] sm:$0xf]
        %v1487 = vld [vmem:[%s337 + $0x8] sm:$0xf]
        %v1488 = vld [vmem:[%s337 + $0xc] sm:$0xf]
        %v1489 = vld [vmem:[%s337 + $0x10] sm:$0xf]
        %v1490 = vld [vmem:[%s337 + $0x14] sm:$0xf]
        %v1491 = vld [vmem:[%s337 + $0x18] sm:$0xf]
        %v1492 = vld [vmem:[%s337 + $0x1c] sm:$0xf]
        %v1493 = vld [vmem:[%s337 + $0x20] sm:$0xf]
        %v1494 = vld [vmem:[%s337 + $0x24] sm:$0xf]
        %v1495 = vld [vmem:[%s337 + $0x28] sm:$0xf]
        %v1496 = vld [vmem:[%s337 + $0x2c] sm:$0xf]
        %v1497 = vld [vmem:[%s337 + $0x30] sm:$0xf]
        %v1498 = vld [vmem:[%s337 + $0x34] sm:$0xf]
        %v1499 = vld [vmem:[%s337 + $0x38] sm:$0xf]
        %v1500 = vld [vmem:[%s337 + $0x3c] sm:$0xf]
        %v1501 = vld [vmem:[%s8] sm:$0x1]
        %v1503 = vperm.slane %v1501, 0
        %v1521 = vunpack.c.l.b16 %v1485
        %v1522 = vunpack.c.l.b16 %v1486
        %v1523 = vunpack.c.l.b16 %v1487
        %v1524 = vunpack.c.l.b16 %v1488
        %v1525 = vunpack.c.l.b16 %v1489
        %v1526 = vunpack.c.l.b16 %v1490
        %v1527 = vunpack.c.l.b16 %v1491
        %v1528 = vunpack.c.l.b16 %v1492
        %v1529 = vunpack.c.l.b16 %v1493
        %v1530 = vunpack.c.l.b16 %v1494
        %v1531 = vunpack.c.l.b16 %v1495
        %v1532 = vunpack.c.l.b16 %v1496
        %v1533 = vunpack.c.l.b16 %v1497
        %v1534 = vunpack.c.l.b16 %v1498
        %v1535 = vunpack.c.l.b16 %v1499
        %v1536 = vunpack.c.l.b16 %v1500
        %v1537 = vpack.c.b16 %v1522, %v1521
        %v1538 = vpack.c.b16 %v1524, %v1523
        %v1539 = vpack.c.b16 %v1526, %v1525
        %v1540 = vpack.c.b16 %v1528, %v1527
        %v1541 = vpack.c.b16 %v1530, %v1529
        %v1542 = vpack.c.b16 %v1532, %v1531
        %v1543 = vpack.c.b16 %v1534, %v1533
        %v1544 = vpack.c.b16 %v1536, %v1535
        %1553 = vmatpush.bf16.msra.mxu0 %v1484
        %1554 = vmatpush.bf16.msra.mxu0 %v1483
        %1555 = vmatpush.bf16.msra.mxu0 %v1482
        %1556 = vmatpush.bf16.msra.mxu0 %v1481
        %1557 = vmatpush.bf16.msra.mxu0 %v1480
        %1558 = vmatpush.bf16.msra.mxu0 %v1479
        %1559 = vmatpush.bf16.msra.mxu0 %v1478
        %1560 = vmatpush.bf16.msra.mxu0 %v1477
        %1561 = vmatmul.bf16.gmra.mxu0 %v1537
        %v1562 = vpop.f32.mrf.mxu0
        %v1563 = vadd.f32 %v1503, %v1562
        %v1564 = vpop.f32.mrf.mxu0
        %v1565 = vadd.f32 %v1503, %v1564
        %1566 = vmatmul.bf16.gmra.mxu0 %v1538
        %v1567 = vpop.f32.mrf.mxu0
        %v1568 = vadd.f32 %v1503, %v1567
        %v1569 = vpop.f32.mrf.mxu0
        %v1570 = vadd.f32 %v1503, %v1569
        %1571 = vmatmul.bf16.gmra.mxu0 %v1539
        %v1572 = vpop.f32.mrf.mxu0
        %v1573 = vadd.f32 %v1503, %v1572
        %v1574 = vpop.f32.mrf.mxu0
        %v1575 = vadd.f32 %v1503, %v1574
        %1576 = vmatmul.bf16.gmra.mxu0 %v1540
        %v1577 = vpop.f32.mrf.mxu0
        %v1578 = vadd.f32 %v1503, %v1577
        %v1579 = vpop.f32.mrf.mxu0
        %v1580 = vadd.f32 %v1503, %v1579
        %1581 = vmatmul.bf16.gmra.mxu0 %v1541
        %v1582 = vpop.f32.mrf.mxu0
        %v1583 = vadd.f32 %v1503, %v1582
        %v1584 = vpop.f32.mrf.mxu0
        %v1585 = vadd.f32 %v1503, %v1584
        %1586 = vmatmul.bf16.gmra.mxu0 %v1542
        %v1587 = vpop.f32.mrf.mxu0
        %v1588 = vadd.f32 %v1503, %v1587
        %v1589 = vpop.f32.mrf.mxu0
        %v1590 = vadd.f32 %v1503, %v1589
        %1591 = vmatmul.bf16.gmra.mxu0 %v1543
        %v1592 = vpop.f32.mrf.mxu0
        %v1593 = vadd.f32 %v1503, %v1592
        %v1594 = vpop.f32.mrf.mxu0
        %v1595 = vadd.f32 %v1503, %v1594
        %1596 = vmatmul.bf16.gmra.mxu0 %v1544
        %v1597 = vpop.f32.mrf.mxu0
        %v1598 = vadd.f32 %v1503, %v1597
        %v1599 = vpop.f32.mrf.mxu0
        %v1600 = vadd.f32 %v1503, %v1599
        %1601 = vdwg.mxu0
        %1602 = vst [vmem:[%s382] sm:$0xff] %v1563
        %1603 = vst [vmem:[%s382 + $0x8] sm:$0xff] %v1565
        %1604 = vst [vmem:[%s382 + $0x10] sm:$0xff] %v1568
        %1605 = vst [vmem:[%s382 + $0x18] sm:$0xff] %v1570
        %1606 = vst [vmem:[%s382 + $0x20] sm:$0xff] %v1573
        %1607 = vst [vmem:[%s382 + $0x28] sm:$0xff] %v1575
        %1608 = vst [vmem:[%s382 + $0x30] sm:$0xff] %v1578
        %1609 = vst [vmem:[%s382 + $0x38] sm:$0xff] %v1580
        %1610 = vst [vmem:[%s382 + $0x40] sm:$0xff] %v1583
        %1611 = vst [vmem:[%s382 + $0x48] sm:$0xff] %v1585
        %1612 = vst [vmem:[%s382 + $0x50] sm:$0xff] %v1588
        %1613 = vst [vmem:[%s382 + $0x58] sm:$0xff] %v1590
        %1614 = vst [vmem:[%s382 + $0x60] sm:$0xff] %v1593
        %1615 = vst [vmem:[%s382 + $0x68] sm:$0xff] %v1595
        %1616 = vst [vmem:[%s382 + $0x70] sm:$0xff] %v1598
        %1617 = vst [vmem:[%s382 + $0x78] sm:$0xff] %v1600
        %s1618 = sand.u32 %s238, 1
        %s1619 = scalar_lea.sflag [#allocation4], %s1618
        %s1620 = sand.u32 %s238, 1
        %s1621 = smul.addr %s1620, 128
        %s1622 = scalar_lea.vmem [#allocation5], %s1621
        // Predicated region
        $region61: #{tpu_custom_call.1} parent=55 // pred_check
          %p1623 = pneg %p248
        $region62: #{tpu_custom_call.1} parent=55 // pred_check_branch
          %1625 = sbr.rel (%p1623) target = $region64
        $region63: #{tpu_custom_call.1} parent=55 // pred_region
          %1627 = vsyncadd %s1619, 0
          %s1628 = smul.addr %s26, 16
          %s1629 = smul.addr %s1628, 8
          %s1630 = scalar_lea.hbm %s9, %s1629
          %s1631 = sshll.u32 %s1622, 4
          %s1632 = int_to_ptr.vmem [resolvable:$true] %s1631
          %s1633 = sshll.u32 %s1630, 4
          %s1634 = int_to_ptr.hbm [resolvable:$true] %s1633
          %1639 = dma.vmem_to_hbm [thread:$0]  %s1632, 2048, %s1634, %s1619, 128, 128, 8
        $region64: #{tpu_custom_call.1} parent=55 // pred_fallthru
          _
      $region56: #{tpu_custom_call.1} parent=5 // pred_fallthru
        _
      %p1640 = scmp.le.s32.totalorder 2, %s21
      // Predicated region
      $region65: #{tpu_custom_call.1} parent=5 // pred_check
        %p1641 = pneg %p1640
      $region66: #{tpu_custom_call.1} parent=5 // pred_check_branch
        %1643 = sbr.rel (%p1641) target = $region68
      $region67: #{tpu_custom_call.1} parent=5 // pred_region
        %s1644 = ssub.s32 %s21, 2
        // Predicated region
        $region69: #{tpu_custom_call.1} parent=67 // pred_check
          %p1645 = pneg %p254
        $region70: #{tpu_custom_call.1} parent=67 // pred_check_branch
          %1647 = sbr.rel (%p1645) target = $region72
        $region71: #{tpu_custom_call.1} parent=67 // pred_region
          %s1648 = sand.u32 %s239, 1
          %s1649 = scalar_lea.sflag [#allocation4], %s1648
          %s1650 = sand.u32 %s239, 1
          %s1651 = smul.addr %s1650, 128
          %s1652 = scalar_lea.vmem [#allocation5], %s1651
          %1654 = dma.done %s1649, 2048
        $region72: #{tpu_custom_call.1} parent=67 // pred_fallthru
          _
      $region68: #{tpu_custom_call.1} parent=5 // pred_fallthru
        _
    $region6: #{tpu_custom_call.1} parent=1 // loop_footer
      %s25 = sadd.s32 1, %s21
    $region7: #{tpu_custom_call.1} parent=1 // loop_footer_branch
      %20 = sbr.rel target = $region3
    $region8: #{tpu_custom_call.1} parent=1 // loop_exit
      _
    %1655 = vsyncpa [#allocation3], 1
    %s1656 = scalar_lea.sflag [#allocation3], 1
    %1657 = vsyncpa %s1656, 1
    %1658 = vsyncpa [#allocation4], 1
    %s1659 = scalar_lea.sflag [#allocation4], 1
    %1660 = vsyncpa %s1659, 1

</llo_original>
